<compile_context>
chip_gen: v7x
topology: tpu7x:2x2x1
jax: 0.10.0
libtpu: 0.0.40
codegen_flags: <defaults>
</compile_context>

<pallas_src>
import functools

import jax
import jax.numpy as jnp
from jax import lax
from jax.experimental import pallas as pl
from jax.experimental.pallas import tpu as pltpu

NEG_PAD = -1e30  # bias value for padded class columns (f32 only)


def _round_up(v: int, m: int) -> int:
    return ((v + m - 1) // m) * m


def make_gd_learner_kernel(steps: int, lr: float, n_batch: int, cp: int):
    """Kernel body for `steps` SGD steps at learning rate `lr` (one task/grid step)."""

    def kernel(x_ref, y_ref, w0_ref, b0_ref,
               w_out_ref, b_out_ref, logits_out_ref):
        x = x_ref[...]                     # (N, Dp) f32  (padded feature cols are 0)
        y_col = y_ref[...]                 # (N, 1)  i32  labels
        # In-kernel one-hot positions; hoisted out of the step loop (no CSE of
        # broadcast_in_dim inside loops).
        col_ids = lax.broadcasted_iota(jnp.int32, (n_batch, cp), 1)
        label_mask = col_ids == y_col      # (N, Cp) bool
        # Fold 1/N (CrossEntropyLoss reduction='mean') into the learning rate.
        lr_eff = jnp.float32(lr / n_batch)

        def step_fn(_, carry):
            w, b = carry
            # forward: logits = x @ W + b   (padded class cols -> ~ -1e30)
            logits = jnp.dot(x, w, preferred_element_type=jnp.float32) + b
            # numerically stable softmax; padded cols contribute exp(-huge)=0
            m = jnp.max(logits, axis=-1, keepdims=True)
            e = jnp.exp(logits - m)
            p = e / jnp.sum(e, axis=-1, keepdims=True)       # exact reciprocal
            # d(loss)/d(logits) (un-normalized; 1/N folded into lr_eff)
            dlogits = jnp.where(label_mask, p - 1.0, p)      # (N, Cp) = p - onehot
            # gw = x^T @ dlogits without an explicit transpose: contract dim 0
            gw = lax.dot_general(
                x, dlogits,
                dimension_numbers=(((0,), (0,)), ((), ())),
                preferred_element_type=jnp.float32)          # (Dp, Cp)
            gb = jnp.sum(dlogits, axis=0, keepdims=True)     # (1, Cp)
            # SGD update (momentum = 0 in GDLearner)
            return (w - lr_eff * gw, b - lr_eff * gb)

        # steps is small & static; with Dp kept small the unroll is spill-free.
        w_final, b_final = lax.fori_loop(
            0, steps, step_fn, (w0_ref[...], b0_ref[...]), unroll=True)

        # Adapted functional model applied to x.
        logits_final = jnp.dot(x, w_final,
                               preferred_element_type=jnp.float32) + b_final

        w_out_ref[...] = w_final
        b_out_ref[...] = b_final
        logits_out_ref[...] = logits_final

    return kernel


def gd_learner_forward_batched(x, y, w0, b0, *, steps: int, lr: float,
                               num_classes: int):
    """Batched GDLearner: T independent tasks, one pallas_call, task grid axis.

    x: (T, N, D) f32, y: (T, N) int, w0: (T, D, C) f32, b0: (T, 1, C) f32.
    Returns adapted (W, b) and the adapted-model logits, all per task.
    """
    t, n, d = x.shape
    c = num_classes

    # Lane-dense class axis only; feature axis padded just to sublane multiple.
    dp = _round_up(max(d, 8), 8)
    cp = _round_up(max(c, 128), 128)

    xp = jnp.pad(x, ((0, 0), (0, 0), (0, dp - d)))                 # zero feature cols
    w0p = jnp.pad(w0, ((0, 0), (0, dp - d), (0, cp - c)))          # zero rows/cols
    b0p = jnp.pad(b0, ((0, 0), (0, 0), (0, cp - c)),
                  constant_values=NEG_PAD)                         # -1e30 padded bias
    y3 = y.reshape(t, n, 1).astype(jnp.int32)                      # labels, no one-hot

    kernel = make_gd_learner_kernel(steps, lr, n, cp)

    def task_spec(*tail):
        return pl.BlockSpec((None,) + tail, lambda i: (i,) + (0,) * len(tail))

    out_shapes = (
        jax.ShapeDtypeStruct((t, dp, cp), jnp.float32),   # adapted W (padded)
        jax.ShapeDtypeStruct((t, 1, cp), jnp.float32),    # adapted b (padded)
        jax.ShapeDtypeStruct((t, n, cp), jnp.float32),    # adapted-model logits (padded)
    )

    # Advisory cost hint (serial per task; latency-dominated at these shapes).
    matmul_flops = t * (2 * steps + 1) * 2 * n * dp * cp
    elemwise_flops = t * steps * (6 * n * cp + 2 * dp * cp)
    cost = pl.CostEstimate(
        flops=matmul_flops + elemwise_flops,
        transcendentals=t * steps * n * cp,
        bytes_accessed=4 * t * (n * dp + dp * cp + cp + n)           # inputs
                       + 4 * t * (dp * cp + cp + n * cp),            # outputs
    )

    w_p, b_p, logits_p = pl.pallas_call(
        kernel,
        out_shape=out_shapes,
        grid_spec=pltpu.PrefetchScalarGridSpec(
            num_scalar_prefetch=0,
            grid=(t,),
            in_specs=[
                task_spec(n, dp),     # x
                task_spec(n, 1),      # y (int32 labels)
                task_spec(dp, cp),    # W0
                task_spec(1, cp),     # b0
            ],
            out_specs=[
                task_spec(dp, cp),    # W adapted
                task_spec(1, cp),     # b adapted
                task_spec(n, cp),     # logits
            ],
        ),
        # Alias W0 -> W_out, b0 -> b_out (inputs 2,3 -> outputs 0,1).
        input_output_aliases={2: 0, 3: 1},
        compiler_params=pltpu.CompilerParams(
            dimension_semantics=("parallel",)),
        cost_estimate=cost,
    )(xp, y3, w0p, b0p)

    # Slice padding away (glue).
    return w_p[:, :d, :c], b_p[:, :, :c], logits_p[:, :, :c]


def gd_learner_forward(x, y, w0, b0, *, steps: int, lr: float, num_classes: int):
    """Single-task GDLearner forward (the original module signature): T = 1."""
    w, b, lg = gd_learner_forward_batched(
        x[None], y[None], w0[None], b0[None],
        steps=steps, lr=lr, num_classes=num_classes)
    return w[0], b[0], lg[0]


if __name__ == "__main__":
    # Small shapes consistent with the module's forward:
    # T=4 independent learner tasks, batch N=8, features D=32, classes C=16;
    # GDLearner(steps=5, lr=0.1) applied to each task.
    T, N, D, C = 4, 8, 32, 16
    STEPS, LR = 5, 0.1

    key = jax.random.PRNGKey(0)
    kx, ky, kw = jax.random.split(key, 3)
    x = jax.random.normal(kx, (T, N, D), dtype=jnp.float32)
    y = jax.random.randint(ky, (T, N), 0, C, dtype=jnp.int32)

    # Deterministic parameter init for the inner linear model (synthetic).
    w0 = 0.02 * jax.random.normal(kw, (T, D, C), dtype=jnp.float32)
    b0 = jnp.zeros((T, 1, C), dtype=jnp.float32)

    fwd = jax.jit(functools.partial(
        gd_learner_forward_batched, steps=STEPS, lr=LR, num_classes=C))
    w_adapt, b_adapt, logits = fwd(x, y, w0, b0)
    jax.block_until_ready((w_adapt, b_adapt, logits))

    # Pure-JAX reference of the same math (per task).
    def ref_single(xs, y1h, w, b):
        for _ in range(STEPS):
            lg = xs @ w + b
            p = jax.nn.softmax(lg, axis=-1)
            dl = (p - y1h) / N
            w = w - LR * (xs.T @ dl)
            b = b - LR * jnp.sum(dl, axis=0, keepdims=True)
        return w, b, xs @ w + b

    ok = True
    for ti in range(T):
        rw, rb, rl = ref_single(
            x[ti], jax.nn.one_hot(y[ti], C, dtype=jnp.float32), w0[ti], b0[ti])
        ok &= bool(jnp.allclose(w_adapt[ti], rw, atol=1e-4, rtol=1e-4))
        ok &= bool(jnp.allclose(b_adapt[ti], rb, atol=1e-4, rtol=1e-4))
        ok &= bool(jnp.allclose(logits[ti], rl, atol=1e-4, rtol=1e-4))
    assert ok

    print("KERNEL_OK")
</pallas_src>

<mosaic_0001>
module attributes {stable_mosaic.version = 11 : i64} {
  func.func @kernel(%arg0: i32, %arg1: memref<1x8x32xf32, #tpu.memory_space<vmem>>, %arg2: memref<1x8x1xi32, #tpu.memory_space<vmem>>, %arg3: memref<1x32x128xf32, #tpu.memory_space<vmem>>, %arg4: memref<1x1x128xf32, #tpu.memory_space<vmem>>, %arg5: memref<1x32x128xf32, #tpu.memory_space<vmem>>, %arg6: memref<1x1x128xf32, #tpu.memory_space<vmem>>, %arg7: memref<1x8x128xf32, #tpu.memory_space<vmem>>) attributes {dimension_semantics = [#tpu.dimension_semantics<parallel>], iteration_bounds = array<i64: 4>, scalar_prefetch = 0 : i64, scratch_operands = 0 : i64, tpu.core_type = #tpu.core_type<tc>, window_params = [{transform_indices = @transform_0, window_bounds = array<i64: 1, 8, 32>}, {transform_indices = @transform_1, window_bounds = array<i64: 1, 8, 1>}, {transform_indices = @transform_2, window_bounds = array<i64: 1, 32, 128>}, {transform_indices = @transform_3, window_bounds = array<i64: 1, 1, 128>}, {transform_indices = @transform_4, window_bounds = array<i64: 1, 32, 128>}, {transform_indices = @transform_5, window_bounds = array<i64: 1, 1, 128>}, {transform_indices = @transform_6, window_bounds = array<i64: 1, 8, 128>}]} {
    %c0 = arith.constant 0 : index
    %c0_0 = arith.constant 0 : index
    %c0_1 = arith.constant 0 : index
    %0 = vector.load %arg1[%c0, %c0_0, %c0_1] : memref<1x8x32xf32, #tpu.memory_space<vmem>>, vector<1x8x32xf32>
    %1 = vector.shape_cast %0 : vector<1x8x32xf32> to vector<8x32xf32>
    %c0_2 = arith.constant 0 : index
    %c0_3 = arith.constant 0 : index
    %c0_4 = arith.constant 0 : index
    %2 = vector.load %arg2[%c0_2, %c0_3, %c0_4] : memref<1x8x1xi32, #tpu.memory_space<vmem>>, vector<1x8x1xi32>
    %3 = vector.shape_cast %2 : vector<1x8x1xi32> to vector<8x1xi32>
    %4 = tpu.iota {dimensions = array<i32: 1>} : vector<8x128xi32>
    %5 = vector.broadcast %3 : vector<8x1xi32> to vector<8x128xi32>
    %6 = arith.cmpi eq, %4, %5 : vector<8x128xi32>
    %c0_5 = arith.constant 0 : index
    %c0_6 = arith.constant 0 : index
    %c0_7 = arith.constant 0 : index
    %7 = vector.load %arg3[%c0_5, %c0_6, %c0_7] : memref<1x32x128xf32, #tpu.memory_space<vmem>>, vector<1x32x128xf32>
    %8 = vector.shape_cast %7 : vector<1x32x128xf32> to vector<32x128xf32>
    %c0_8 = arith.constant 0 : index
    %c0_9 = arith.constant 0 : index
    %c0_10 = arith.constant 0 : index
    %9 = vector.load %arg4[%c0_8, %c0_9, %c0_10] : memref<1x1x128xf32, #tpu.memory_space<vmem>>, vector<1x1x128xf32>
    %10 = vector.shape_cast %9 : vector<1x1x128xf32> to vector<1x128xf32>
    %cst = arith.constant 1.250000e-02 : f32
    %c0_i32 = arith.constant 0 : i32
    %cst_11 = arith.constant dense<0.000000e+00> : vector<8x128xf32>
    %11 = tpu.matmul %1, %8, %cst_11 {dimension_numbers = #tpu.dot_dimension_numbers<[1], [0], [0], [1], [0, 0, 1, 1], [], []>} : vector<8x32xf32>, vector<32x128xf32>, vector<8x128xf32> -> vector<8x128xf32>
    %12 = vector.broadcast %10 : vector<1x128xf32> to vector<8x128xf32>
    %13 = arith.addf %11, %12 : vector<8x128xf32>
    %cst_12 = arith.constant dense<0xFF800000> : vector<8xf32>
    %14 = vector.multi_reduction <maximumf>, %13, %cst_12 [1] : vector<8x128xf32> to vector<8xf32>
    %15 = vector.shape_cast %14 : vector<8xf32> to vector<8x1xf32>
    %16 = vector.broadcast %15 : vector<8x1xf32> to vector<8x128xf32>
    %17 = arith.subf %13, %16 : vector<8x128xf32>
    %18 = math.exp %17 : vector<8x128xf32>
    %cst_13 = arith.constant dense<0.000000e+00> : vector<8xf32>
    %19 = vector.multi_reduction <add>, %18, %cst_13 [1] : vector<8x128xf32> to vector<8xf32>
    %20 = vector.shape_cast %19 : vector<8xf32> to vector<8x1xf32>
    %21 = vector.broadcast %20 : vector<8x1xf32> to vector<8x128xf32>
    %22 = arith.divf %18, %21 : vector<8x128xf32>
    %cst_14 = arith.constant 1.000000e+00 : f32
    %23 = vector.broadcast %cst_14 : f32 to vector<8x128xf32>
    %24 = arith.subf %22, %23 : vector<8x128xf32>
    %25 = arith.select %6, %24, %22 : vector<8x128xi1>, vector<8x128xf32>
    %cst_15 = arith.constant dense<0.000000e+00> : vector<32x128xf32>
    %26 = tpu.matmul %1, %25, %cst_15 {dimension_numbers = #tpu.dot_dimension_numbers<[0], [0], [1], [1], [0, 1, 1, 1], [], []>} : vector<8x32xf32>, vector<8x128xf32>, vector<32x128xf32> -> vector<32x128xf32>
    %cst_16 = arith.constant dense<0.000000e+00> : vector<128xf32>
    %27 = vector.multi_reduction <add>, %25, %cst_16 [0] : vector<8x128xf32> to vector<128xf32>
    %28 = vector.shape_cast %27 : vector<128xf32> to vector<1x128xf32>
    %29 = vector.broadcast %cst : f32 to vector<32x128xf32>
    %30 = arith.mulf %29, %26 : vector<32x128xf32>
    %31 = arith.subf %8, %30 : vector<32x128xf32>
    %32 = vector.broadcast %cst : f32 to vector<1x128xf32>
    %33 = arith.mulf %32, %28 : vector<1x128xf32>
    %34 = arith.subf %10, %33 : vector<1x128xf32>
    %c1_i32 = arith.constant 1 : i32
    %cst_17 = arith.constant dense<0.000000e+00> : vector<8x128xf32>
    %35 = tpu.matmul %1, %31, %cst_17 {dimension_numbers = #tpu.dot_dimension_numbers<[1], [0], [0], [1], [0, 0, 1, 1], [], []>} : vector<8x32xf32>, vector<32x128xf32>, vector<8x128xf32> -> vector<8x128xf32>
    %36 = vector.broadcast %34 : vector<1x128xf32> to vector<8x128xf32>
    %37 = arith.addf %35, %36 : vector<8x128xf32>
    %cst_18 = arith.constant dense<0xFF800000> : vector<8xf32>
    %38 = vector.multi_reduction <maximumf>, %37, %cst_18 [1] : vector<8x128xf32> to vector<8xf32>
    %39 = vector.shape_cast %38 : vector<8xf32> to vector<8x1xf32>
    %40 = vector.broadcast %39 : vector<8x1xf32> to vector<8x128xf32>
    %41 = arith.subf %37, %40 : vector<8x128xf32>
    %42 = math.exp %41 : vector<8x128xf32>
    %cst_19 = arith.constant dense<0.000000e+00> : vector<8xf32>
    %43 = vector.multi_reduction <add>, %42, %cst_19 [1] : vector<8x128xf32> to vector<8xf32>
    %44 = vector.shape_cast %43 : vector<8xf32> to vector<8x1xf32>
    %45 = vector.broadcast %44 : vector<8x1xf32> to vector<8x128xf32>
    %46 = arith.divf %42, %45 : vector<8x128xf32>
    %cst_20 = arith.constant 1.000000e+00 : f32
    %47 = vector.broadcast %cst_20 : f32 to vector<8x128xf32>
    %48 = arith.subf %46, %47 : vector<8x128xf32>
    %49 = arith.select %6, %48, %46 : vector<8x128xi1>, vector<8x128xf32>
    %cst_21 = arith.constant dense<0.000000e+00> : vector<32x128xf32>
    %50 = tpu.matmul %1, %49, %cst_21 {dimension_numbers = #tpu.dot_dimension_numbers<[0], [0], [1], [1], [0, 1, 1, 1], [], []>} : vector<8x32xf32>, vector<8x128xf32>, vector<32x128xf32> -> vector<32x128xf32>
    %cst_22 = arith.constant dense<0.000000e+00> : vector<128xf32>
    %51 = vector.multi_reduction <add>, %49, %cst_22 [0] : vector<8x128xf32> to vector<128xf32>
    %52 = vector.shape_cast %51 : vector<128xf32> to vector<1x128xf32>
    %53 = vector.broadcast %cst : f32 to vector<32x128xf32>
    %54 = arith.mulf %53, %50 : vector<32x128xf32>
    %55 = arith.subf %31, %54 : vector<32x128xf32>
    %56 = vector.broadcast %cst : f32 to vector<1x128xf32>
    %57 = arith.mulf %56, %52 : vector<1x128xf32>
    %58 = arith.subf %34, %57 : vector<1x128xf32>
    %c2_i32 = arith.constant 2 : i32
    %cst_23 = arith.constant dense<0.000000e+00> : vector<8x128xf32>
    %59 = tpu.matmul %1, %55, %cst_23 {dimension_numbers = #tpu.dot_dimension_numbers<[1], [0], [0], [1], [0, 0, 1, 1], [], []>} : vector<8x32xf32>, vector<32x128xf32>, vector<8x128xf32> -> vector<8x128xf32>
    %60 = vector.broadcast %58 : vector<1x128xf32> to vector<8x128xf32>
    %61 = arith.addf %59, %60 : vector<8x128xf32>
    %cst_24 = arith.constant dense<0xFF800000> : vector<8xf32>
    %62 = vector.multi_reduction <maximumf>, %61, %cst_24 [1] : vector<8x128xf32> to vector<8xf32>
    %63 = vector.shape_cast %62 : vector<8xf32> to vector<8x1xf32>
    %64 = vector.broadcast %63 : vector<8x1xf32> to vector<8x128xf32>
    %65 = arith.subf %61, %64 : vector<8x128xf32>
    %66 = math.exp %65 : vector<8x128xf32>
    %cst_25 = arith.constant dense<0.000000e+00> : vector<8xf32>
    %67 = vector.multi_reduction <add>, %66, %cst_25 [1] : vector<8x128xf32> to vector<8xf32>
    %68 = vector.shape_cast %67 : vector<8xf32> to vector<8x1xf32>
    %69 = vector.broadcast %68 : vector<8x1xf32> to vector<8x128xf32>
    %70 = arith.divf %66, %69 : vector<8x128xf32>
    %cst_26 = arith.constant 1.000000e+00 : f32
    %71 = vector.broadcast %cst_26 : f32 to vector<8x128xf32>
    %72 = arith.subf %70, %71 : vector<8x128xf32>
    %73 = arith.select %6, %72, %70 : vector<8x128xi1>, vector<8x128xf32>
    %cst_27 = arith.constant dense<0.000000e+00> : vector<32x128xf32>
    %74 = tpu.matmul %1, %73, %cst_27 {dimension_numbers = #tpu.dot_dimension_numbers<[0], [0], [1], [1], [0, 1, 1, 1], [], []>} : vector<8x32xf32>, vector<8x128xf32>, vector<32x128xf32> -> vector<32x128xf32>
    %cst_28 = arith.constant dense<0.000000e+00> : vector<128xf32>
    %75 = vector.multi_reduction <add>, %73, %cst_28 [0] : vector<8x128xf32> to vector<128xf32>
    %76 = vector.shape_cast %75 : vector<128xf32> to vector<1x128xf32>
    %77 = vector.broadcast %cst : f32 to vector<32x128xf32>
    %78 = arith.mulf %77, %74 : vector<32x128xf32>
    %79 = arith.subf %55, %78 : vector<32x128xf32>
    %80 = vector.broadcast %cst : f32 to vector<1x128xf32>
    %81 = arith.mulf %80, %76 : vector<1x128xf32>
    %82 = arith.subf %58, %81 : vector<1x128xf32>
    %c3_i32 = arith.constant 3 : i32
    %cst_29 = arith.constant dense<0.000000e+00> : vector<8x128xf32>
    %83 = tpu.matmul %1, %79, %cst_29 {dimension_numbers = #tpu.dot_dimension_numbers<[1], [0], [0], [1], [0, 0, 1, 1], [], []>} : vector<8x32xf32>, vector<32x128xf32>, vector<8x128xf32> -> vector<8x128xf32>
    %84 = vector.broadcast %82 : vector<1x128xf32> to vector<8x128xf32>
    %85 = arith.addf %83, %84 : vector<8x128xf32>
    %cst_30 = arith.constant dense<0xFF800000> : vector<8xf32>
    %86 = vector.multi_reduction <maximumf>, %85, %cst_30 [1] : vector<8x128xf32> to vector<8xf32>
    %87 = vector.shape_cast %86 : vector<8xf32> to vector<8x1xf32>
    %88 = vector.broadcast %87 : vector<8x1xf32> to vector<8x128xf32>
    %89 = arith.subf %85, %88 : vector<8x128xf32>
    %90 = math.exp %89 : vector<8x128xf32>
    %cst_31 = arith.constant dense<0.000000e+00> : vector<8xf32>
    %91 = vector.multi_reduction <add>, %90, %cst_31 [1] : vector<8x128xf32> to vector<8xf32>
    %92 = vector.shape_cast %91 : vector<8xf32> to vector<8x1xf32>
    %93 = vector.broadcast %92 : vector<8x1xf32> to vector<8x128xf32>
    %94 = arith.divf %90, %93 : vector<8x128xf32>
    %cst_32 = arith.constant 1.000000e+00 : f32
    %95 = vector.broadcast %cst_32 : f32 to vector<8x128xf32>
    %96 = arith.subf %94, %95 : vector<8x128xf32>
    %97 = arith.select %6, %96, %94 : vector<8x128xi1>, vector<8x128xf32>
    %cst_33 = arith.constant dense<0.000000e+00> : vector<32x128xf32>
    %98 = tpu.matmul %1, %97, %cst_33 {dimension_numbers = #tpu.dot_dimension_numbers<[0], [0], [1], [1], [0, 1, 1, 1], [], []>} : vector<8x32xf32>, vector<8x128xf32>, vector<32x128xf32> -> vector<32x128xf32>
    %cst_34 = arith.constant dense<0.000000e+00> : vector<128xf32>
    %99 = vector.multi_reduction <add>, %97, %cst_34 [0] : vector<8x128xf32> to vector<128xf32>
    %100 = vector.shape_cast %99 : vector<128xf32> to vector<1x128xf32>
    %101 = vector.broadcast %cst : f32 to vector<32x128xf32>
    %102 = arith.mulf %101, %98 : vector<32x128xf32>
    %103 = arith.subf %79, %102 : vector<32x128xf32>
    %104 = vector.broadcast %cst : f32 to vector<1x128xf32>
    %105 = arith.mulf %104, %100 : vector<1x128xf32>
    %106 = arith.subf %82, %105 : vector<1x128xf32>
    %c4_i32 = arith.constant 4 : i32
    %cst_35 = arith.constant dense<0.000000e+00> : vector<8x128xf32>
    %107 = tpu.matmul %1, %103, %cst_35 {dimension_numbers = #tpu.dot_dimension_numbers<[1], [0], [0], [1], [0, 0, 1, 1], [], []>} : vector<8x32xf32>, vector<32x128xf32>, vector<8x128xf32> -> vector<8x128xf32>
    %108 = vector.broadcast %106 : vector<1x128xf32> to vector<8x128xf32>
    %109 = arith.addf %107, %108 : vector<8x128xf32>
    %cst_36 = arith.constant dense<0xFF800000> : vector<8xf32>
    %110 = vector.multi_reduction <maximumf>, %109, %cst_36 [1] : vector<8x128xf32> to vector<8xf32>
    %111 = vector.shape_cast %110 : vector<8xf32> to vector<8x1xf32>
    %112 = vector.broadcast %111 : vector<8x1xf32> to vector<8x128xf32>
    %113 = arith.subf %109, %112 : vector<8x128xf32>
    %114 = math.exp %113 : vector<8x128xf32>
    %cst_37 = arith.constant dense<0.000000e+00> : vector<8xf32>
    %115 = vector.multi_reduction <add>, %114, %cst_37 [1] : vector<8x128xf32> to vector<8xf32>
    %116 = vector.shape_cast %115 : vector<8xf32> to vector<8x1xf32>
    %117 = vector.broadcast %116 : vector<8x1xf32> to vector<8x128xf32>
    %118 = arith.divf %114, %117 : vector<8x128xf32>
    %cst_38 = arith.constant 1.000000e+00 : f32
    %119 = vector.broadcast %cst_38 : f32 to vector<8x128xf32>
    %120 = arith.subf %118, %119 : vector<8x128xf32>
    %121 = arith.select %6, %120, %118 : vector<8x128xi1>, vector<8x128xf32>
    %cst_39 = arith.constant dense<0.000000e+00> : vector<32x128xf32>
    %122 = tpu.matmul %1, %121, %cst_39 {dimension_numbers = #tpu.dot_dimension_numbers<[0], [0], [1], [1], [0, 1, 1, 1], [], []>} : vector<8x32xf32>, vector<8x128xf32>, vector<32x128xf32> -> vector<32x128xf32>
    %cst_40 = arith.constant dense<0.000000e+00> : vector<128xf32>
    %123 = vector.multi_reduction <add>, %121, %cst_40 [0] : vector<8x128xf32> to vector<128xf32>
    %124 = vector.shape_cast %123 : vector<128xf32> to vector<1x128xf32>
    %125 = vector.broadcast %cst : f32 to vector<32x128xf32>
    %126 = arith.mulf %125, %122 : vector<32x128xf32>
    %127 = arith.subf %103, %126 : vector<32x128xf32>
    %128 = vector.broadcast %cst : f32 to vector<1x128xf32>
    %129 = arith.mulf %128, %124 : vector<1x128xf32>
    %130 = arith.subf %106, %129 : vector<1x128xf32>
    %cst_41 = arith.constant dense<0.000000e+00> : vector<8x128xf32>
    %131 = tpu.matmul %1, %127, %cst_41 {dimension_numbers = #tpu.dot_dimension_numbers<[1], [0], [0], [1], [0, 0, 1, 1], [], []>} : vector<8x32xf32>, vector<32x128xf32>, vector<8x128xf32> -> vector<8x128xf32>
    %132 = vector.broadcast %130 : vector<1x128xf32> to vector<8x128xf32>
    %133 = arith.addf %131, %132 : vector<8x128xf32>
    %c0_42 = arith.constant 0 : index
    %c0_43 = arith.constant 0 : index
    %c0_44 = arith.constant 0 : index
    %134 = vector.load %arg5[%c0_42, %c0_43, %c0_44] : memref<1x32x128xf32, #tpu.memory_space<vmem>>, vector<1x32x128xf32>
    %135 = vector.shape_cast %134 : vector<1x32x128xf32> to vector<32x128xf32>
    %136 = vector.shape_cast %127 : vector<32x128xf32> to vector<1x32x128xf32>
    tpu.vector_store %arg5[%c0_42, %c0_43, %c0_44], %136 {strides = array<i32>} : memref<1x32x128xf32, #tpu.memory_space<vmem>>, vector<1x32x128xf32>,
    %c0_45 = arith.constant 0 : index
    %c0_46 = arith.constant 0 : index
    %c0_47 = arith.constant 0 : index
    %137 = vector.load %arg6[%c0_45, %c0_46, %c0_47] : memref<1x1x128xf32, #tpu.memory_space<vmem>>, vector<1x1x128xf32>
    %138 = vector.shape_cast %137 : vector<1x1x128xf32> to vector<1x128xf32>
    %139 = vector.shape_cast %130 : vector<1x128xf32> to vector<1x1x128xf32>
    tpu.vector_store %arg6[%c0_45, %c0_46, %c0_47], %139 {strides = array<i32>} : memref<1x1x128xf32, #tpu.memory_space<vmem>>, vector<1x1x128xf32>,
    %c0_48 = arith.constant 0 : index
    %c0_49 = arith.constant 0 : index
    %c0_50 = arith.constant 0 : index
    %140 = vector.load %arg7[%c0_48, %c0_49, %c0_50] : memref<1x8x128xf32, #tpu.memory_space<vmem>>, vector<1x8x128xf32>
    %141 = vector.shape_cast %140 : vector<1x8x128xf32> to vector<8x128xf32>
    %142 = vector.shape_cast %133 : vector<8x128xf32> to vector<1x8x128xf32>
    tpu.vector_store %arg7[%c0_48, %c0_49, %c0_50], %142 {strides = array<i32>} : memref<1x8x128xf32, #tpu.memory_space<vmem>>, vector<1x8x128xf32>,
    return
  }
  func.func @transform_0(%arg0: i32) -> (i32, i32, i32) {
    %c0_i32 = arith.constant 0 : i32
    %c0_i32_0 = arith.constant 0 : i32
    %c0_i32_1 = arith.constant 0 : i32
    return %arg0, %c0_i32, %c0_i32_0 : i32, i32, i32
  }
  func.func @transform_1(%arg0: i32) -> (i32, i32, i32) {
    %c0_i32 = arith.constant 0 : i32
    %c0_i32_0 = arith.constant 0 : i32
    %c0_i32_1 = arith.constant 0 : i32
    return %arg0, %c0_i32, %c0_i32_0 : i32, i32, i32
  }
  func.func @transform_2(%arg0: i32) -> (i32, i32, i32) {
    %c0_i32 = arith.constant 0 : i32
    %c0_i32_0 = arith.constant 0 : i32
    %c0_i32_1 = arith.constant 0 : i32
    return %arg0, %c0_i32, %c0_i32_0 : i32, i32, i32
  }
  func.func @transform_3(%arg0: i32) -> (i32, i32, i32) {
    %c0_i32 = arith.constant 0 : i32
    %c0_i32_0 = arith.constant 0 : i32
    %c0_i32_1 = arith.constant 0 : i32
    return %arg0, %c0_i32, %c0_i32_0 : i32, i32, i32
  }
  func.func @transform_4(%arg0: i32) -> (i32, i32, i32) {
    %c0_i32 = arith.constant 0 : i32
    %c0_i32_0 = arith.constant 0 : i32
    %c0_i32_1 = arith.constant 0 : i32
    return %arg0, %c0_i32, %c0_i32_0 : i32, i32, i32
  }
  func.func @transform_5(%arg0: i32) -> (i32, i32, i32) {
    %c0_i32 = arith.constant 0 : i32
    %c0_i32_0 = arith.constant 0 : i32
    %c0_i32_1 = arith.constant 0 : i32
    return %arg0, %c0_i32, %c0_i32_0 : i32, i32, i32
  }
  func.func @transform_6(%arg0: i32) -> (i32, i32, i32) {
    %c0_i32 = arith.constant 0 : i32
    %c0_i32_0 = arith.constant 0 : i32
    %c0_i32_1 = arith.constant 0 : i32
    return %arg0, %c0_i32, %c0_i32_0 : i32, i32, i32
  }
}

</mosaic_0001>

<llo_original>
// kernel: gd_learner_forward_batched.1
$region0: #{gd_learner_forward_batched.1}
  #allocation0 [shape = 'u32[]', space=smem, size = 0x4, offset = 0x4, fixed_abs, tag = 'smem constant byte address 0x4 - core index']
  #allocation1 [shape = 'u32[144,128]{1,0:T(1,128)}', space=vmem, size = 0x12000, scoped, tag = 'internal scratch']
  %s0 = inlined_call_operand.vmem [shape: f32[4,8,32], index: 0, kind: input, shape index: {}]
  %s1 = inlined_call_operand.vmem [shape: s32[4,8,1], index: 1, kind: input, shape index: {}]
  %s2 = inlined_call_operand.vmem [shape: f32[4,32,128], index: 2, kind: input, shape index: {}, may-alias: {2,4}]
  %s3 = inlined_call_operand.vmem [shape: f32[4,1,128], index: 3, kind: input, shape index: {}, may-alias: {3,5}]
  %s4 = inlined_call_operand.vmem [shape: f32[4,32,128], index: 4, kind: output, shape index: {0}, may-alias: {2,4}]
  %s5 = inlined_call_operand.vmem [shape: f32[4,1,128], index: 5, kind: output, shape index: {1}, may-alias: {3,5}]
  %s6 = inlined_call_operand.hbm [shape: f32[4,8,128], index: 6, kind: output, shape index: {2}]
  %7 = xla_tuple %s4, %s5, %s6
  %s8 = sld [smem:[#allocation0]]
  $region65: #{gd_learner_forward_batched.1} parent=0
    _
  %s10 = ssub.s32 1, %s8
  %s11 = scalar_select 0, %s10, %s8
  $region1: #{gd_learner_forward_batched.1} parent=0
    #allocation2 [shape = 'u8[8192]{0}', space=vmem, size = 0x2000, scoped, tag = 'output window, operand 2']
    #allocation3 [shape = 's32[2]{0}', space=sflag, size = 0x8, scoped, tag = 'scoped memory for gd_learner_forward_batched.1']
    %12 = vsyncpa [#allocation3], 0
    %s13 = scalar_lea.sflag [#allocation3], 1
    %14 = vsyncpa %s13, 0
    loop: start=0, step=1, limit=6
    $region2: #{gd_learner_forward_batched.1} parent=1 // loop_pre_header
      _
    $region3: #{gd_learner_forward_batched.1} parent=1 // loop_header
      %s16 = sphi 0, %s20
      %p17 = scmp.ge.s32.totalorder %s16, 6
      %s26 = sphi 0, %s28
      %s29 = sphi 0, %s26
      %s30 = sphi 0, %s29
      %s46 = sphi 0, %s30
      %s52 = sphi 0, %s54
      %s55 = sphi 0, %s52
      %s56 = sphi 0, %s55
      %s72 = sphi 0, %s56
      %s78 = sphi 0, %s80
      %s81 = sphi 0, %s78
      %s82 = sphi 0, %s81
      %s98 = sphi 0, %s82
      %s104 = sphi 0, %s106
      %s107 = sphi 0, %s104
      %s108 = sphi 0, %s107
      %s124 = sphi 0, %s108
      %s130 = sphi 0, %s132
      %s133 = sphi 0, %s130
      %s134 = sphi 0, %s133
      %s150 = sphi 0, %s134
      %s156 = sphi 0, %s158
      %s159 = sphi 0, %s156
      %s160 = sphi 0, %s159
      %s176 = sphi 0, %s160
      %s182 = sphi 0, %s184
      %s185 = sphi 0, %s182
      %s186 = sphi 0, %s185
      %s202 = sphi 0, %s186
    $region4: #{gd_learner_forward_batched.1} parent=1 // loop_header_branch
      %19 = sbr.rel (%p17) target = $region8
    $region5: #{gd_learner_forward_batched.1} parent=1 // loop_body
      %s21 = ssub.s32 %s16, 1
      %s22 = ssub.s32 %s16, 2
      %s23 = sadd.s32 %s16, 1
      %s24 = ssub.s32 %s16, %s23
      %p25 = scmp.eq.s32.totalorder %s24, 0
      %s27 = sadd.s32 %s26, 1
      %s28 = scalar_select %p25, %s26, %s27
      %p31 = pneg %p25
      %p32 = scmp.eq.s32.totalorder %s16, 3
      %p33 = por %p31, %p32
      %p34 = scmp.ne.s32.totalorder %s26, %s29
      %p35 = scmp.eq.s32.totalorder %s16, 0
      %p36 = por %p34, %p35
      %p37 = scmp.ne.s32.totalorder %s26, %s29
      %p38 = scmp.eq.s32.totalorder %s21, 3
      %p39 = por %p37, %p38
      %p40 = scmp.ne.s32.totalorder %s29, %s30
      %p41 = scmp.eq.s32.totalorder %s21, 0
      %p42 = por %p40, %p41
      %p43 = scmp.ne.s32.totalorder %s29, %s30
      %p44 = scmp.eq.s32.totalorder %s22, 3
      %p45 = por %p43, %p44
      %p47 = scmp.ne.s32.totalorder %s30, %s46
      %p48 = scmp.eq.s32.totalorder %s22, 0
      %p49 = por %p47, %p48
      %s50 = ssub.s32 %s16, %s23
      %p51 = scmp.eq.s32.totalorder %s50, 0
      %s53 = sadd.s32 %s52, 1
      %s54 = scalar_select %p51, %s52, %s53
      %p57 = pneg %p51
      %p58 = scmp.eq.s32.totalorder %s16, 3
      %p59 = por %p57, %p58
      %p60 = scmp.ne.s32.totalorder %s52, %s55
      %p61 = scmp.eq.s32.totalorder %s16, 0
      %p62 = por %p60, %p61
      %p63 = scmp.ne.s32.totalorder %s52, %s55
      %p64 = scmp.eq.s32.totalorder %s21, 3
      %p65 = por %p63, %p64
      %p66 = scmp.ne.s32.totalorder %s55, %s56
      %p67 = scmp.eq.s32.totalorder %s21, 0
      %p68 = por %p66, %p67
      %p69 = scmp.ne.s32.totalorder %s55, %s56
      %p70 = scmp.eq.s32.totalorder %s22, 3
      %p71 = por %p69, %p70
      %p73 = scmp.ne.s32.totalorder %s56, %s72
      %p74 = scmp.eq.s32.totalorder %s22, 0
      %p75 = por %p73, %p74
      %s76 = ssub.s32 %s16, %s23
      %p77 = scmp.eq.s32.totalorder %s76, 0
      %s79 = sadd.s32 %s78, 1
      %s80 = scalar_select %p77, %s78, %s79
      %p83 = pneg %p77
      %p84 = scmp.eq.s32.totalorder %s16, 3
      %p85 = por %p83, %p84
      %p86 = scmp.ne.s32.totalorder %s78, %s81
      %p87 = scmp.eq.s32.totalorder %s16, 0
      %p88 = por %p86, %p87
      %p89 = scmp.ne.s32.totalorder %s78, %s81
      %p90 = scmp.eq.s32.totalorder %s21, 3
      %p91 = por %p89, %p90
      %p92 = scmp.ne.s32.totalorder %s81, %s82
      %p93 = scmp.eq.s32.totalorder %s21, 0
      %p94 = por %p92, %p93
      %p95 = scmp.ne.s32.totalorder %s81, %s82
      %p96 = scmp.eq.s32.totalorder %s22, 3
      %p97 = por %p95, %p96
      %p99 = scmp.ne.s32.totalorder %s82, %s98
      %p100 = scmp.eq.s32.totalorder %s22, 0
      %p101 = por %p99, %p100
      %s102 = ssub.s32 %s16, %s23
      %p103 = scmp.eq.s32.totalorder %s102, 0
      %s105 = sadd.s32 %s104, 1
      %s106 = scalar_select %p103, %s104, %s105
      %p109 = pneg %p103
      %p110 = scmp.eq.s32.totalorder %s16, 3
      %p111 = por %p109, %p110
      %p112 = scmp.ne.s32.totalorder %s104, %s107
      %p113 = scmp.eq.s32.totalorder %s16, 0
      %p114 = por %p112, %p113
      %p115 = scmp.ne.s32.totalorder %s104, %s107
      %p116 = scmp.eq.s32.totalorder %s21, 3
      %p117 = por %p115, %p116
      %p118 = scmp.ne.s32.totalorder %s107, %s108
      %p119 = scmp.eq.s32.totalorder %s21, 0
      %p120 = por %p118, %p119
      %p121 = scmp.ne.s32.totalorder %s107, %s108
      %p122 = scmp.eq.s32.totalorder %s22, 3
      %p123 = por %p121, %p122
      %p125 = scmp.ne.s32.totalorder %s108, %s124
      %p126 = scmp.eq.s32.totalorder %s22, 0
      %p127 = por %p125, %p126
      %s128 = ssub.s32 %s16, %s23
      %p129 = scmp.eq.s32.totalorder %s128, 0
      %s131 = sadd.s32 %s130, 1
      %s132 = scalar_select %p129, %s130, %s131
      %p135 = pneg %p129
      %p136 = scmp.eq.s32.totalorder %s16, 3
      %p137 = por %p135, %p136
      %p138 = scmp.ne.s32.totalorder %s130, %s133
      %p139 = scmp.eq.s32.totalorder %s16, 0
      %p140 = por %p138, %p139
      %p141 = scmp.ne.s32.totalorder %s130, %s133
      %p142 = scmp.eq.s32.totalorder %s21, 3
      %p143 = por %p141, %p142
      %p144 = scmp.ne.s32.totalorder %s133, %s134
      %p145 = scmp.eq.s32.totalorder %s21, 0
      %p146 = por %p144, %p145
      %p147 = scmp.ne.s32.totalorder %s133, %s134
      %p148 = scmp.eq.s32.totalorder %s22, 3
      %p149 = por %p147, %p148
      %p151 = scmp.ne.s32.totalorder %s134, %s150
      %p152 = scmp.eq.s32.totalorder %s22, 0
      %p153 = por %p151, %p152
      %s154 = ssub.s32 %s16, %s23
      %p155 = scmp.eq.s32.totalorder %s154, 0
      %s157 = sadd.s32 %s156, 1
      %s158 = scalar_select %p155, %s156, %s157
      %p161 = pneg %p155
      %p162 = scmp.eq.s32.totalorder %s16, 3
      %p163 = por %p161, %p162
      %p164 = scmp.ne.s32.totalorder %s156, %s159
      %p165 = scmp.eq.s32.totalorder %s16, 0
      %p166 = por %p164, %p165
      %p167 = scmp.ne.s32.totalorder %s156, %s159
      %p168 = scmp.eq.s32.totalorder %s21, 3
      %p169 = por %p167, %p168
      %p170 = scmp.ne.s32.totalorder %s159, %s160
      %p171 = scmp.eq.s32.totalorder %s21, 0
      %p172 = por %p170, %p171
      %p173 = scmp.ne.s32.totalorder %s159, %s160
      %p174 = scmp.eq.s32.totalorder %s22, 3
      %p175 = por %p173, %p174
      %p177 = scmp.ne.s32.totalorder %s160, %s176
      %p178 = scmp.eq.s32.totalorder %s22, 0
      %p179 = por %p177, %p178
      %s180 = ssub.s32 %s16, %s23
      %p181 = scmp.eq.s32.totalorder %s180, 0
      %s183 = sadd.s32 %s182, 1
      %s184 = scalar_select %p181, %s182, %s183
      %p187 = pneg %p181
      %p188 = scmp.eq.s32.totalorder %s16, 3
      %p189 = por %p187, %p188
      %p190 = scmp.ne.s32.totalorder %s182, %s185
      %p191 = scmp.eq.s32.totalorder %s16, 0
      %p192 = por %p190, %p191
      %p193 = scmp.ne.s32.totalorder %s182, %s185
      %p194 = scmp.eq.s32.totalorder %s21, 3
      %p195 = por %p193, %p194
      %p196 = scmp.ne.s32.totalorder %s185, %s186
      %p197 = scmp.eq.s32.totalorder %s21, 0
      %p198 = por %p196, %p197
      %p199 = scmp.ne.s32.totalorder %s185, %s186
      %p200 = scmp.eq.s32.totalorder %s22, 3
      %p201 = por %p199, %p200
      %p203 = scmp.ne.s32.totalorder %s186, %s202
      %p204 = scmp.eq.s32.totalorder %s22, 0
      %p205 = por %p203, %p204
      %p206 = scmp.le.s32.totalorder 1, %s16
      %p207 = scmp.lt.s32.totalorder %s16, 5
      %p208 = pnand %p206, %p207
      %p209 = pneg %p208
      // Predicated region
      $region9: #{gd_learner_forward_batched.1} parent=5 // pred_check
        _
      $region10: #{gd_learner_forward_batched.1} parent=5 // pred_check_branch
        %211 = sbr.rel (%p208) target = $region12
      $region11: #{gd_learner_forward_batched.1} parent=5 // pred_region
        %s212 = ssub.s32 %s16, 1
      $region12: #{gd_learner_forward_batched.1} parent=5 // pred_fallthru
        _
      %p213 = scmp.lt.s32.totalorder %s16, 4
      // Predicated region
      $region13: #{gd_learner_forward_batched.1} parent=5 // pred_check
        %p214 = pneg %p213
      $region14: #{gd_learner_forward_batched.1} parent=5 // pred_check_branch
        %216 = sbr.rel (%p214) target = $region16
      $region15: #{gd_learner_forward_batched.1} parent=5 // pred_region
        // Predicated region
        $region17: #{gd_learner_forward_batched.1} parent=15 // pred_check
          %p217 = pneg %p36
        $region18: #{gd_learner_forward_batched.1} parent=15 // pred_check_branch
          %219 = sbr.rel (%p217) target = $region20
        $region19: #{gd_learner_forward_batched.1} parent=15 // pred_region
          %p220 = scmp.lt.s32.totalorder %s16, 3
          %s221 = scalar_select %p220, %s16, 3
          %s222 = smul.addr %s221, 8
          %s223 = scalar_lea.vmem %s0, %s222
        $region20: #{gd_learner_forward_batched.1} parent=15 // pred_fallthru
          _
        // Predicated region
        $region21: #{gd_learner_forward_batched.1} parent=15 // pred_check
          %p224 = pneg %p62
        $region22: #{gd_learner_forward_batched.1} parent=15 // pred_check_branch
          %226 = sbr.rel (%p224) target = $region24
        $region23: #{gd_learner_forward_batched.1} parent=15 // pred_region
          %p227 = scmp.lt.s32.totalorder %s16, 3
          %s228 = scalar_select %p227, %s16, 3
          %s229 = smul.addr %s228, 8
          %s230 = scalar_lea.vmem %s1, %s229
        $region24: #{gd_learner_forward_batched.1} parent=15 // pred_fallthru
          _
        // Predicated region
        $region25: #{gd_learner_forward_batched.1} parent=15 // pred_check
          %p231 = pneg %p88
        $region26: #{gd_learner_forward_batched.1} parent=15 // pred_check_branch
          %233 = sbr.rel (%p231) target = $region28
        $region27: #{gd_learner_forward_batched.1} parent=15 // pred_region
          %p234 = scmp.lt.s32.totalorder %s16, 3
          %s235 = scalar_select %p234, %s16, 3
          %s236 = smul.addr %s235, 4
          %s237 = smul.addr %s236, 8
          %s238 = scalar_lea.vmem %s2, %s237
        $region28: #{gd_learner_forward_batched.1} parent=15 // pred_fallthru
          _
        // Predicated region
        $region29: #{gd_learner_forward_batched.1} parent=15 // pred_check
          %p239 = pneg %p114
        $region30: #{gd_learner_forward_batched.1} parent=15 // pred_check_branch
          %241 = sbr.rel (%p239) target = $region32
        $region31: #{gd_learner_forward_batched.1} parent=15 // pred_region
          %p242 = scmp.lt.s32.totalorder %s16, 3
          %s243 = scalar_select %p242, %s16, 3
          %s244 = scalar_lea.vmem %s3, %s243
        $region32: #{gd_learner_forward_batched.1} parent=15 // pred_fallthru
          _
      $region16: #{gd_learner_forward_batched.1} parent=5 // pred_fallthru
        _
      %p245 = scmp.le.s32.totalorder 1, %s16
      %p246 = scmp.lt.s32.totalorder %s16, 5
      %p247 = pnand %p245, %p246
      %p248 = pneg %p247
      // Predicated region
      $region33: #{gd_learner_forward_batched.1} parent=5 // pred_check
        _
      $region34: #{gd_learner_forward_batched.1} parent=5 // pred_check_branch
        %250 = sbr.rel (%p247) target = $region36
      $region35: #{gd_learner_forward_batched.1} parent=5 // pred_region
        %s251 = ssub.s32 %s16, 1
        %p252 = scmp.lt.s32.totalorder %s21, 3
        %s253 = scalar_select %p252, %s21, 3
        %s254 = smul.addr %s253, 8
        %s255 = scalar_lea.vmem %s0, %s254
        %p256 = pneg %p42
        %p257 = pneg %p39
        %p258 = scmp.lt.s32.totalorder %s21, 3
        %s259 = scalar_select %p258, %s21, 3
        %s260 = smul.addr %s259, 8
        %s261 = scalar_lea.vmem %s1, %s260
        %p262 = pneg %p68
        %p263 = pneg %p65
        %p264 = scmp.lt.s32.totalorder %s21, 3
        %s265 = scalar_select %p264, %s21, 3
        %s266 = smul.addr %s265, 4
        %s267 = smul.addr %s266, 8
        %s268 = scalar_lea.vmem %s2, %s267
        %p269 = pneg %p94
        %p270 = pneg %p91
        %p271 = scmp.lt.s32.totalorder %s21, 3
        %s272 = scalar_select %p271, %s21, 3
        %s273 = scalar_lea.vmem %s3, %s272
        %p274 = pneg %p120
        %p275 = pneg %p117
        %p276 = pneg %p146
        %p277 = pneg %p143
        %p278 = scmp.lt.s32.totalorder %s21, 3
        %s279 = scalar_select %p278, %s21, 3
        %s280 = smul.addr %s279, 4
        %s281 = smul.addr %s280, 8
        %s282 = scalar_lea.vmem %s4, %s281
        %p283 = pneg %p172
        %p284 = pneg %p169
        %p285 = scmp.lt.s32.totalorder %s21, 3
        %s286 = scalar_select %p285, %s21, 3
        %s287 = scalar_lea.vmem %s5, %s286
        %p288 = pneg %p198
        %p289 = pneg %p195
        %s290 = sand.u32 %s185, 1
        %s291 = scalar_lea.sflag [#allocation3], %s290
        %s292 = sand.u32 %s185, 1
        %s293 = smul.addr %s292, 8
        %s294 = scalar_lea.vmem [#allocation2], %s293
        %p295 = scmp.lt.s32.totalorder %s21, 3
        %s296 = scalar_select %p295, %s21, 3
        %s297 = smul.addr %s296, 8
        %s298 = scalar_lea.vmem %s0, %s297
        %p299 = scmp.lt.s32.totalorder %s21, 3
        %s300 = scalar_select %p299, %s21, 3
        %s301 = smul.addr %s300, 8
        %s302 = scalar_lea.vmem %s1, %s301
        %p303 = scmp.lt.s32.totalorder %s21, 3
        %s304 = scalar_select %p303, %s21, 3
        %s305 = smul.addr %s304, 4
        %s306 = smul.addr %s305, 8
        %s307 = scalar_lea.vmem %s2, %s306
        %p308 = scmp.lt.s32.totalorder %s21, 3
        %s309 = scalar_select %p308, %s21, 3
        %s310 = scalar_lea.vmem %s3, %s309
        %p311 = scmp.lt.s32.totalorder %s21, 3
        %s312 = scalar_select %p311, %s21, 3
        %s313 = smul.addr %s312, 4
        %s314 = smul.addr %s313, 8
        %s315 = scalar_lea.vmem %s4, %s314
        %p316 = scmp.lt.s32.totalorder %s21, 3
        %s317 = scalar_select %p316, %s21, 3
        %s318 = scalar_lea.vmem %s5, %s317
        %v319 = vld [vmem:[%s298] sm:$0xff]
        %v320 = vld [vmem:[%s302] sm:$0xff]
        %v321 = vlaneseq
        %v322 = vand.u32 %v321, 127
        %323 = vset.pattern.permute.xlu0 0
        %324 = vperm.xlu0 %323, %v320
        %v325 = vpop.permute.xlu0 %324
        %vm326 = vcmp.eq.s32.totalorder %v322, %v325
        %v327 = vld [vmem:[%s307] sm:$0xff]
        %v328 = vld [vmem:[%s307 + $0x8] sm:$0xff]
        %v329 = vld [vmem:[%s307 + $0x10] sm:$0xff]
        %v330 = vld [vmem:[%s307 + $0x18] sm:$0xff]
        %v331 = vld [vmem:[%s310] sm:$0x1]
        %v333 = vlaneseq
        %v334 = vshrl.u32 %v333, 7
        %v335 = vsub.s32 0, %v334
        %v336 = vrot.slane %v331, %v335
        %vm338 = vcmask 261120
        %v340 = vsel %vm338, %v319, 0
        %342 = vmatprep.subr.mxu0 0.0
        %343 = vmatpush1.msra.mxu0 %v327
        %344 = vmatprep.subr.mxu0 0.0
        %345 = vmatpush1.msra.mxu0 %v328
        %346 = vmatprep.subr.mxu0 0.0
        %347 = vmatpush1.msra.mxu0 %v329
        %348 = vmatprep.subr.mxu0 0.0
        %349 = vmatpush1.msra.mxu0 %v330
        %350 = vmatprep.subr.mxu0 0.0
        %351 = vmatpush1.msra.mxu0 0.0
        %352 = vmatprep.subr.mxu0 0.0
        %353 = vmatpush1.msra.mxu0 0.0
        %354 = vmatprep.subr.mxu0 0.0
        %355 = vmatpush1.msra.mxu0 0.0
        %356 = vmatprep.subr.mxu0 0.0
        %357 = vmatpush1.msra.mxu0 0.0
        %358 = vmatprep.subr.mxu0 0.0
        %359 = vmatpush1.msra.mxu0 0.0
        %360 = vmatprep.subr.mxu0 0.0
        %361 = vmatpush1.msra.mxu0 0.0
        %362 = vmatprep.subr.mxu0 0.0
        %363 = vmatpush1.msra.mxu0 0.0
        %364 = vmatprep.subr.mxu0 0.0
        %365 = vmatpush1.msra.mxu0 0.0
        %366 = vmatprep.subr.mxu0 0.0
        %367 = vmatpush1.msra.mxu0 0.0
        %368 = vmatprep.subr.mxu0 0.0
        %369 = vmatpush1.msra.mxu0 0.0
        %370 = vmatprep.subr.mxu0 0.0
        %371 = vmatpush1.msra.mxu0 0.0
        %372 = vmatprep.subr.mxu0 0.0
        %373 = vmatpush1.msra.mxu0 0.0
        %374 = vmatprep.subr.mxu0 0.0
        %375 = vmatpush1.msra.mxu0 0.0
        %376 = vmatprep.subr.mxu0 0.0
        %377 = vmatpush1.msra.mxu0 0.0
        %378 = vmatprep.subr.mxu0 0.0
        %379 = vmatpush1.msra.mxu0 0.0
        %380 = vmatprep.subr.mxu0 0.0
        %381 = vmatpush1.msra.mxu0 0.0
        %382 = vmatprep.subr.mxu0 0.0
        %383 = vmatpush1.msra.mxu0 0.0
        %384 = vmatprep.subr.mxu0 0.0
        %385 = vmatpush1.msra.mxu0 0.0
        %386 = vmatprep.subr.mxu0 0.0
        %387 = vmatpush1.msra.mxu0 0.0
        %388 = vmatprep.subr.mxu0 0.0
        %389 = vmatpush1.msra.mxu0 0.0
        %390 = vmatprep.subr.mxu0 0.0
        %391 = vmatpush1.msra.mxu0 0.0
        %392 = vmatprep.subr.mxu0 0.0
        %393 = vmatpush1.msra.mxu0 0.0
        %394 = vmatprep.subr.mxu0 0.0
        %395 = vmatpush1.msra.mxu0 0.0
        %396 = vmatprep.subr.mxu0 0.0
        %397 = vmatpush1.msra.mxu0 0.0
        %398 = vmatprep.subr.mxu0 0.0
        %399 = vmatpush1.msra.mxu0 0.0
        %400 = vmatprep.subr.mxu0 0.0
        %401 = vmatpush1.msra.mxu0 0.0
        %402 = vmatprep.subr.mxu0 0.0
        %403 = vmatpush1.msra.mxu0 0.0
        %404 = vmatprep.subr.mxu0 0.0
        %405 = vmatpush1.msra.mxu0 0.0
        %406 = vmatprep.mubr.f32.mxu0 0.0
        %407 = vmatmul.mubr.f32.gmra.mrb[0].mxu0 %v340
        %v408 = vpop.f32.mrb[0].mxu0
        %v409 = vadd.f32 %v336, %v408
        %v410 = vpop.f32.mrb[0].mxu0
        %411 = vdwg.mxu0
        %412 = vmax.xlane.f32.xlu0 %v409
        %v413 = vpop.xlane.xlu0 %412
        %v414 = vsub.f32 %v409, %v413
        %v415 = vmul.f32 %v414, 1.442695
        %v416 = vpow.pop %v415
        %417 = vadd.xlane.f32.xlu0 %v416
        %v418 = vpop.xlane.xlu0 %417
        %v419 = vrcp.pop %v418
        %v420 = vmul.f32 %v416, %v419
        %v421 = vsub.f32 %v420, 1.0
        %v422 = vsel %vm326, %v421, %v420
        %423 = vxpose.xlu0.b32.start [1/16] %v319, 128
        %424 = vxpose.xlu0.b32.cont [2/16] 0.0, 128
        %425 = vxpose.xlu0.b32.cont [3/16] 0.0, 128
        %426 = vxpose.xlu0.b32.cont [4/16] 0.0, 128
        %427 = vxpose.xlu0.b32.cont [5/16] 0.0, 128
        %428 = vxpose.xlu0.b32.cont [6/16] 0.0, 128
        %429 = vxpose.xlu0.b32.cont [7/16] 0.0, 128
        %430 = vxpose.xlu0.b32.cont [8/16] 0.0, 128
        %431 = vxpose.xlu0.b32.cont [9/16] 0.0, 128
        %432 = vxpose.xlu0.b32.cont [10/16] 0.0, 128
        %433 = vxpose.xlu0.b32.cont [11/16] 0.0, 128
        %434 = vxpose.xlu0.b32.cont [12/16] 0.0, 128
        %435 = vxpose.xlu0.b32.cont [13/16] 0.0, 128
        %436 = vxpose.xlu0.b32.cont [14/16] 0.0, 128
        %437 = vxpose.xlu0.b32.cont [15/16] 0.0, 128
        %438 = vxpose.xlu0.b32.end [16/16] 0.0, 128
        %v439 = vpop.trf.xlu0
        %v440 = vpop.trf.xlu0
        %v441 = vpop.trf.xlu0
        %v442 = vpop.trf.xlu0
        %v443 = vpop.trf.xlu0
        %v444 = vpop.trf.xlu0
        %v445 = vpop.trf.xlu0
        %v446 = vpop.trf.xlu0
        %v447 = vpop.trf.xlu0
        %v448 = vpop.trf.xlu0
        %v449 = vpop.trf.xlu0
        %v450 = vpop.trf.xlu0
        %v451 = vpop.trf.xlu0
        %v452 = vpop.trf.xlu0
        %v453 = vpop.trf.xlu0
        %v454 = vpop.trf.xlu0
        %vm455 = vcmask 64512
        %v457 = vsel %vm455, %v439, 0
        %v460 = vsel %vm455, %v440, 0
        %v463 = vsel %vm455, %v441, 0
        %v466 = vsel %vm455, %v442, 0
        %468 = vmatprep.subr.mxu0 0.0
        %469 = vmatpush1.msra.mxu0 %v422
        %470 = vmatprep.subr.mxu0 0.0
        %471 = vmatpush1.msra.mxu0 0.0
        %472 = vmatprep.subr.mxu0 0.0
        %473 = vmatpush1.msra.mxu0 0.0
        %474 = vmatprep.subr.mxu0 0.0
        %475 = vmatpush1.msra.mxu0 0.0
        %476 = vmatprep.subr.mxu0 0.0
        %477 = vmatpush1.msra.mxu0 0.0
        %478 = vmatprep.subr.mxu0 0.0
        %479 = vmatpush1.msra.mxu0 0.0
        %480 = vmatprep.subr.mxu0 0.0
        %481 = vmatpush1.msra.mxu0 0.0
        %482 = vmatprep.subr.mxu0 0.0
        %483 = vmatpush1.msra.mxu0 0.0
        %484 = vmatprep.subr.mxu0 0.0
        %485 = vmatpush1.msra.mxu0 0.0
        %486 = vmatprep.subr.mxu0 0.0
        %487 = vmatpush1.msra.mxu0 0.0
        %488 = vmatprep.subr.mxu0 0.0
        %489 = vmatpush1.msra.mxu0 0.0
        %490 = vmatprep.subr.mxu0 0.0
        %491 = vmatpush1.msra.mxu0 0.0
        %492 = vmatprep.subr.mxu0 0.0
        %493 = vmatpush1.msra.mxu0 0.0
        %494 = vmatprep.subr.mxu0 0.0
        %495 = vmatpush1.msra.mxu0 0.0
        %496 = vmatprep.subr.mxu0 0.0
        %497 = vmatpush1.msra.mxu0 0.0
        %498 = vmatprep.subr.mxu0 0.0
        %499 = vmatpush1.msra.mxu0 0.0
        %500 = vmatprep.subr.mxu0 0.0
        %501 = vmatpush1.msra.mxu0 0.0
        %502 = vmatprep.subr.mxu0 0.0
        %503 = vmatpush1.msra.mxu0 0.0
        %504 = vmatprep.subr.mxu0 0.0
        %505 = vmatpush1.msra.mxu0 0.0
        %506 = vmatprep.subr.mxu0 0.0
        %507 = vmatpush1.msra.mxu0 0.0
        %508 = vmatprep.subr.mxu0 0.0
        %509 = vmatpush1.msra.mxu0 0.0
        %510 = vmatprep.subr.mxu0 0.0
        %511 = vmatpush1.msra.mxu0 0.0
        %512 = vmatprep.subr.mxu0 0.0
        %513 = vmatpush1.msra.mxu0 0.0
        %514 = vmatprep.subr.mxu0 0.0
        %515 = vmatpush1.msra.mxu0 0.0
        %516 = vmatprep.subr.mxu0 0.0
        %517 = vmatpush1.msra.mxu0 0.0
        %518 = vmatprep.subr.mxu0 0.0
        %519 = vmatpush1.msra.mxu0 0.0
        %520 = vmatprep.subr.mxu0 0.0
        %521 = vmatpush1.msra.mxu0 0.0
        %522 = vmatprep.subr.mxu0 0.0
        %523 = vmatpush1.msra.mxu0 0.0
        %524 = vmatprep.subr.mxu0 0.0
        %525 = vmatpush1.msra.mxu0 0.0
        %526 = vmatprep.subr.mxu0 0.0
        %527 = vmatpush1.msra.mxu0 0.0
        %528 = vmatprep.subr.mxu0 0.0
        %529 = vmatpush1.msra.mxu0 0.0
        %530 = vmatprep.subr.mxu0 0.0
        %531 = vmatpush1.msra.mxu0 0.0
        %532 = vmatprep.mubr.f32.mxu0 0.0
        %533 = vmatmul.mubr.f32.gmra.mrb[0].mxu0 %v457
        %v534 = vpop.f32.mrb[0].mxu0
        %v535 = vadd.f32 0.0, %v534
        %v536 = vpop.f32.mrb[0].mxu0
        %537 = vmatprep.mubr.f32.mxu0 0.0
        %538 = vmatmul.mubr.f32.gmra.mrb[0].mxu0 %v460
        %v539 = vpop.f32.mrb[0].mxu0
        %v540 = vadd.f32 0.0, %v539
        %v541 = vpop.f32.mrb[0].mxu0
        %542 = vmatprep.mubr.f32.mxu0 0.0
        %543 = vmatmul.mubr.f32.gmra.mrb[0].mxu0 %v463
        %v544 = vpop.f32.mrb[0].mxu0
        %v545 = vadd.f32 0.0, %v544
        %v546 = vpop.f32.mrb[0].mxu0
        %547 = vmatprep.mubr.f32.mxu0 0.0
        %548 = vmatmul.mubr.f32.gmra.mrb[0].mxu0 %v466
        %v549 = vpop.f32.mrb[0].mxu0
        %v550 = vadd.f32 0.0, %v549
        %v551 = vpop.f32.mrb[0].mxu0
        %552 = vdwg.mxu0
        %v553 = vrot.slane %v422, 4
        %v554 = vadd.f32 %v422, %v553
        %v555 = vrot.slane %v554, 2
        %v556 = vadd.f32 %v554, %v555
        %v557 = vrot.slane %v556, 1
        %v558 = vadd.f32 %v556, %v557
        %v559 = vmul.f32 %v535, 0.0125
        %v560 = vmul.f32 %v540, 0.0125
        %v561 = vmul.f32 %v545, 0.0125
        %v562 = vmul.f32 %v550, 0.0125
        %v563 = vsub.f32 %v327, %v559
        %v564 = vsub.f32 %v328, %v560
        %v565 = vsub.f32 %v329, %v561
        %v566 = vsub.f32 %v330, %v562
        %v567 = vmul.f32 %v558, 0.0125
        %v568 = vsub.f32 %v331, %v567
        %v570 = vlaneseq
        %v571 = vshrl.u32 %v570, 7
        %v572 = vsub.s32 0, %v571
        %v573 = vrot.slane %v568, %v572
        %575 = vmatprep.subr.mxu0 0.0
        %576 = vmatpush1.msra.mxu0 %v563
        %577 = vmatprep.subr.mxu0 0.0
        %578 = vmatpush1.msra.mxu0 %v564
        %579 = vmatprep.subr.mxu0 0.0
        %580 = vmatpush1.msra.mxu0 %v565
        %581 = vmatprep.subr.mxu0 0.0
        %582 = vmatpush1.msra.mxu0 %v566
        %583 = vmatprep.subr.mxu0 0.0
        %584 = vmatpush1.msra.mxu0 0.0
        %585 = vmatprep.subr.mxu0 0.0
        %586 = vmatpush1.msra.mxu0 0.0
        %587 = vmatprep.subr.mxu0 0.0
        %588 = vmatpush1.msra.mxu0 0.0
        %589 = vmatprep.subr.mxu0 0.0
        %590 = vmatpush1.msra.mxu0 0.0
        %591 = vmatprep.subr.mxu0 0.0
        %592 = vmatpush1.msra.mxu0 0.0
        %593 = vmatprep.subr.mxu0 0.0
        %594 = vmatpush1.msra.mxu0 0.0
        %595 = vmatprep.subr.mxu0 0.0
        %596 = vmatpush1.msra.mxu0 0.0
        %597 = vmatprep.subr.mxu0 0.0
        %598 = vmatpush1.msra.mxu0 0.0
        %599 = vmatprep.subr.mxu0 0.0
        %600 = vmatpush1.msra.mxu0 0.0
        %601 = vmatprep.subr.mxu0 0.0
        %602 = vmatpush1.msra.mxu0 0.0
        %603 = vmatprep.subr.mxu0 0.0
        %604 = vmatpush1.msra.mxu0 0.0
        %605 = vmatprep.subr.mxu0 0.0
        %606 = vmatpush1.msra.mxu0 0.0
        %607 = vmatprep.subr.mxu0 0.0
        %608 = vmatpush1.msra.mxu0 0.0
        %609 = vmatprep.subr.mxu0 0.0
        %610 = vmatpush1.msra.mxu0 0.0
        %611 = vmatprep.subr.mxu0 0.0
        %612 = vmatpush1.msra.mxu0 0.0
        %613 = vmatprep.subr.mxu0 0.0
        %614 = vmatpush1.msra.mxu0 0.0
        %615 = vmatprep.subr.mxu0 0.0
        %616 = vmatpush1.msra.mxu0 0.0
        %617 = vmatprep.subr.mxu0 0.0
        %618 = vmatpush1.msra.mxu0 0.0
        %619 = vmatprep.subr.mxu0 0.0
        %620 = vmatpush1.msra.mxu0 0.0
        %621 = vmatprep.subr.mxu0 0.0
        %622 = vmatpush1.msra.mxu0 0.0
        %623 = vmatprep.subr.mxu0 0.0
        %624 = vmatpush1.msra.mxu0 0.0
        %625 = vmatprep.subr.mxu0 0.0
        %626 = vmatpush1.msra.mxu0 0.0
        %627 = vmatprep.subr.mxu0 0.0
        %628 = vmatpush1.msra.mxu0 0.0
        %629 = vmatprep.subr.mxu0 0.0
        %630 = vmatpush1.msra.mxu0 0.0
        %631 = vmatprep.subr.mxu0 0.0
        %632 = vmatpush1.msra.mxu0 0.0
        %633 = vmatprep.subr.mxu0 0.0
        %634 = vmatpush1.msra.mxu0 0.0
        %635 = vmatprep.subr.mxu0 0.0
        %636 = vmatpush1.msra.mxu0 0.0
        %637 = vmatprep.subr.mxu0 0.0
        %638 = vmatpush1.msra.mxu0 0.0
        %639 = vmatprep.mubr.f32.mxu0 0.0
        %640 = vmatmul.mubr.f32.gmra.mrb[0].mxu0 %v340
        %v641 = vpop.f32.mrb[0].mxu0
        %v642 = vadd.f32 %v573, %v641
        %v643 = vpop.f32.mrb[0].mxu0
        %644 = vdwg.mxu0
        %645 = vmax.xlane.f32.xlu0 %v642
        %v646 = vpop.xlane.xlu0 %645
        %v647 = vsub.f32 %v642, %v646
        %v648 = vmul.f32 %v647, 1.442695
        %v649 = vpow.pop %v648
        %650 = vadd.xlane.f32.xlu0 %v649
        %v651 = vpop.xlane.xlu0 %650
        %v652 = vrcp.pop %v651
        %v653 = vmul.f32 %v649, %v652
        %v654 = vsub.f32 %v653, 1.0
        %v655 = vsel %vm326, %v654, %v653
        %656 = vmatprep.subr.mxu0 0.0
        %657 = vmatpush1.msra.mxu0 %v655
        %658 = vmatprep.subr.mxu0 0.0
        %659 = vmatpush1.msra.mxu0 0.0
        %660 = vmatprep.subr.mxu0 0.0
        %661 = vmatpush1.msra.mxu0 0.0
        %662 = vmatprep.subr.mxu0 0.0
        %663 = vmatpush1.msra.mxu0 0.0
        %664 = vmatprep.subr.mxu0 0.0
        %665 = vmatpush1.msra.mxu0 0.0
        %666 = vmatprep.subr.mxu0 0.0
        %667 = vmatpush1.msra.mxu0 0.0
        %668 = vmatprep.subr.mxu0 0.0
        %669 = vmatpush1.msra.mxu0 0.0
        %670 = vmatprep.subr.mxu0 0.0
        %671 = vmatpush1.msra.mxu0 0.0
        %672 = vmatprep.subr.mxu0 0.0
        %673 = vmatpush1.msra.mxu0 0.0
        %674 = vmatprep.subr.mxu0 0.0
        %675 = vmatpush1.msra.mxu0 0.0
        %676 = vmatprep.subr.mxu0 0.0
        %677 = vmatpush1.msra.mxu0 0.0
        %678 = vmatprep.subr.mxu0 0.0
        %679 = vmatpush1.msra.mxu0 0.0
        %680 = vmatprep.subr.mxu0 0.0
        %681 = vmatpush1.msra.mxu0 0.0
        %682 = vmatprep.subr.mxu0 0.0
        %683 = vmatpush1.msra.mxu0 0.0
        %684 = vmatprep.subr.mxu0 0.0
        %685 = vmatpush1.msra.mxu0 0.0
        %686 = vmatprep.subr.mxu0 0.0
        %687 = vmatpush1.msra.mxu0 0.0
        %688 = vmatprep.subr.mxu0 0.0
        %689 = vmatpush1.msra.mxu0 0.0
        %690 = vmatprep.subr.mxu0 0.0
        %691 = vmatpush1.msra.mxu0 0.0
        %692 = vmatprep.subr.mxu0 0.0
        %693 = vmatpush1.msra.mxu0 0.0
        %694 = vmatprep.subr.mxu0 0.0
        %695 = vmatpush1.msra.mxu0 0.0
        %696 = vmatprep.subr.mxu0 0.0
        %697 = vmatpush1.msra.mxu0 0.0
        %698 = vmatprep.subr.mxu0 0.0
        %699 = vmatpush1.msra.mxu0 0.0
        %700 = vmatprep.subr.mxu0 0.0
        %701 = vmatpush1.msra.mxu0 0.0
        %702 = vmatprep.subr.mxu0 0.0
        %703 = vmatpush1.msra.mxu0 0.0
        %704 = vmatprep.subr.mxu0 0.0
        %705 = vmatpush1.msra.mxu0 0.0
        %706 = vmatprep.subr.mxu0 0.0
        %707 = vmatpush1.msra.mxu0 0.0
        %708 = vmatprep.subr.mxu0 0.0
        %709 = vmatpush1.msra.mxu0 0.0
        %710 = vmatprep.subr.mxu0 0.0
        %711 = vmatpush1.msra.mxu0 0.0
        %712 = vmatprep.subr.mxu0 0.0
        %713 = vmatpush1.msra.mxu0 0.0
        %714 = vmatprep.subr.mxu0 0.0
        %715 = vmatpush1.msra.mxu0 0.0
        %716 = vmatprep.subr.mxu0 0.0
        %717 = vmatpush1.msra.mxu0 0.0
        %718 = vmatprep.subr.mxu0 0.0
        %719 = vmatpush1.msra.mxu0 0.0
        %720 = vmatprep.mubr.f32.mxu0 0.0
        %721 = vmatmul.mubr.f32.gmra.mrb[0].mxu0 %v457
        %v722 = vpop.f32.mrb[0].mxu0
        %v723 = vadd.f32 0.0, %v722
        %v724 = vpop.f32.mrb[0].mxu0
        %725 = vmatprep.mubr.f32.mxu0 0.0
        %726 = vmatmul.mubr.f32.gmra.mrb[0].mxu0 %v460
        %v727 = vpop.f32.mrb[0].mxu0
        %v728 = vadd.f32 0.0, %v727
        %v729 = vpop.f32.mrb[0].mxu0
        %730 = vmatprep.mubr.f32.mxu0 0.0
        %731 = vmatmul.mubr.f32.gmra.mrb[0].mxu0 %v463
        %v732 = vpop.f32.mrb[0].mxu0
        %v733 = vadd.f32 0.0, %v732
        %v734 = vpop.f32.mrb[0].mxu0
        %735 = vmatprep.mubr.f32.mxu0 0.0
        %736 = vmatmul.mubr.f32.gmra.mrb[0].mxu0 %v466
        %v737 = vpop.f32.mrb[0].mxu0
        %v738 = vadd.f32 0.0, %v737
        %v739 = vpop.f32.mrb[0].mxu0
        %740 = vdwg.mxu0
        %v741 = vrot.slane %v655, 4
        %v742 = vadd.f32 %v655, %v741
        %v743 = vrot.slane %v742, 2
        %v744 = vadd.f32 %v742, %v743
        %v745 = vrot.slane %v744, 1
        %v746 = vadd.f32 %v744, %v745
        %v747 = vmul.f32 %v723, 0.0125
        %v748 = vmul.f32 %v728, 0.0125
        %v749 = vmul.f32 %v733, 0.0125
        %v750 = vmul.f32 %v738, 0.0125
        %v751 = vsub.f32 %v563, %v747
        %v752 = vsub.f32 %v564, %v748
        %v753 = vsub.f32 %v565, %v749
        %v754 = vsub.f32 %v566, %v750
        %v755 = vmul.f32 %v746, 0.0125
        %v756 = vsub.f32 %v568, %v755
        %v758 = vlaneseq
        %v759 = vshrl.u32 %v758, 7
        %v760 = vsub.s32 0, %v759
        %v761 = vrot.slane %v756, %v760
        %763 = vmatprep.subr.mxu0 0.0
        %764 = vmatpush1.msra.mxu0 %v751
        %765 = vmatprep.subr.mxu0 0.0
        %766 = vmatpush1.msra.mxu0 %v752
        %767 = vmatprep.subr.mxu0 0.0
        %768 = vmatpush1.msra.mxu0 %v753
        %769 = vmatprep.subr.mxu0 0.0
        %770 = vmatpush1.msra.mxu0 %v754
        %771 = vmatprep.subr.mxu0 0.0
        %772 = vmatpush1.msra.mxu0 0.0
        %773 = vmatprep.subr.mxu0 0.0
        %774 = vmatpush1.msra.mxu0 0.0
        %775 = vmatprep.subr.mxu0 0.0
        %776 = vmatpush1.msra.mxu0 0.0
        %777 = vmatprep.subr.mxu0 0.0
        %778 = vmatpush1.msra.mxu0 0.0
        %779 = vmatprep.subr.mxu0 0.0
        %780 = vmatpush1.msra.mxu0 0.0
        %781 = vmatprep.subr.mxu0 0.0
        %782 = vmatpush1.msra.mxu0 0.0
        %783 = vmatprep.subr.mxu0 0.0
        %784 = vmatpush1.msra.mxu0 0.0
        %785 = vmatprep.subr.mxu0 0.0
        %786 = vmatpush1.msra.mxu0 0.0
        %787 = vmatprep.subr.mxu0 0.0
        %788 = vmatpush1.msra.mxu0 0.0
        %789 = vmatprep.subr.mxu0 0.0
        %790 = vmatpush1.msra.mxu0 0.0
        %791 = vmatprep.subr.mxu0 0.0
        %792 = vmatpush1.msra.mxu0 0.0
        %793 = vmatprep.subr.mxu0 0.0
        %794 = vmatpush1.msra.mxu0 0.0
        %795 = vmatprep.subr.mxu0 0.0
        %796 = vmatpush1.msra.mxu0 0.0
        %797 = vmatprep.subr.mxu0 0.0
        %798 = vmatpush1.msra.mxu0 0.0
        %799 = vmatprep.subr.mxu0 0.0
        %800 = vmatpush1.msra.mxu0 0.0
        %801 = vmatprep.subr.mxu0 0.0
        %802 = vmatpush1.msra.mxu0 0.0
        %803 = vmatprep.subr.mxu0 0.0
        %804 = vmatpush1.msra.mxu0 0.0
        %805 = vmatprep.subr.mxu0 0.0
        %806 = vmatpush1.msra.mxu0 0.0
        %807 = vmatprep.subr.mxu0 0.0
        %808 = vmatpush1.msra.mxu0 0.0
        %809 = vmatprep.subr.mxu0 0.0
        %810 = vmatpush1.msra.mxu0 0.0
        %811 = vmatprep.subr.mxu0 0.0
        %812 = vmatpush1.msra.mxu0 0.0
        %813 = vmatprep.subr.mxu0 0.0
        %814 = vmatpush1.msra.mxu0 0.0
        %815 = vmatprep.subr.mxu0 0.0
        %816 = vmatpush1.msra.mxu0 0.0
        %817 = vmatprep.subr.mxu0 0.0
        %818 = vmatpush1.msra.mxu0 0.0
        %819 = vmatprep.subr.mxu0 0.0
        %820 = vmatpush1.msra.mxu0 0.0
        %821 = vmatprep.subr.mxu0 0.0
        %822 = vmatpush1.msra.mxu0 0.0
        %823 = vmatprep.subr.mxu0 0.0
        %824 = vmatpush1.msra.mxu0 0.0
        %825 = vmatprep.subr.mxu0 0.0
        %826 = vmatpush1.msra.mxu0 0.0
        %827 = vmatprep.mubr.f32.mxu0 0.0
        %828 = vmatmul.mubr.f32.gmra.mrb[0].mxu0 %v340
        %v829 = vpop.f32.mrb[0].mxu0
        %v830 = vadd.f32 %v761, %v829
        %v831 = vpop.f32.mrb[0].mxu0
        %832 = vdwg.mxu0
        %833 = vmax.xlane.f32.xlu0 %v830
        %v834 = vpop.xlane.xlu0 %833
        %v835 = vsub.f32 %v830, %v834
        %v836 = vmul.f32 %v835, 1.442695
        %v837 = vpow.pop %v836
        %838 = vadd.xlane.f32.xlu0 %v837
        %v839 = vpop.xlane.xlu0 %838
        %v840 = vrcp.pop %v839
        %v841 = vmul.f32 %v837, %v840
        %v842 = vsub.f32 %v841, 1.0
        %v843 = vsel %vm326, %v842, %v841
        %844 = vmatprep.subr.mxu0 0.0
        %845 = vmatpush1.msra.mxu0 %v843
        %846 = vmatprep.subr.mxu0 0.0
        %847 = vmatpush1.msra.mxu0 0.0
        %848 = vmatprep.subr.mxu0 0.0
        %849 = vmatpush1.msra.mxu0 0.0
        %850 = vmatprep.subr.mxu0 0.0
        %851 = vmatpush1.msra.mxu0 0.0
        %852 = vmatprep.subr.mxu0 0.0
        %853 = vmatpush1.msra.mxu0 0.0
        %854 = vmatprep.subr.mxu0 0.0
        %855 = vmatpush1.msra.mxu0 0.0
        %856 = vmatprep.subr.mxu0 0.0
        %857 = vmatpush1.msra.mxu0 0.0
        %858 = vmatprep.subr.mxu0 0.0
        %859 = vmatpush1.msra.mxu0 0.0
        %860 = vmatprep.subr.mxu0 0.0
        %861 = vmatpush1.msra.mxu0 0.0
        %862 = vmatprep.subr.mxu0 0.0
        %863 = vmatpush1.msra.mxu0 0.0
        %864 = vmatprep.subr.mxu0 0.0
        %865 = vmatpush1.msra.mxu0 0.0
        %866 = vmatprep.subr.mxu0 0.0
        %867 = vmatpush1.msra.mxu0 0.0
        %868 = vmatprep.subr.mxu0 0.0
        %869 = vmatpush1.msra.mxu0 0.0
        %870 = vmatprep.subr.mxu0 0.0
        %871 = vmatpush1.msra.mxu0 0.0
        %872 = vmatprep.subr.mxu0 0.0
        %873 = vmatpush1.msra.mxu0 0.0
        %874 = vmatprep.subr.mxu0 0.0
        %875 = vmatpush1.msra.mxu0 0.0
        %876 = vmatprep.subr.mxu0 0.0
        %877 = vmatpush1.msra.mxu0 0.0
        %878 = vmatprep.subr.mxu0 0.0
        %879 = vmatpush1.msra.mxu0 0.0
        %880 = vmatprep.subr.mxu0 0.0
        %881 = vmatpush1.msra.mxu0 0.0
        %882 = vmatprep.subr.mxu0 0.0
        %883 = vmatpush1.msra.mxu0 0.0
        %884 = vmatprep.subr.mxu0 0.0
        %885 = vmatpush1.msra.mxu0 0.0
        %886 = vmatprep.subr.mxu0 0.0
        %887 = vmatpush1.msra.mxu0 0.0
        %888 = vmatprep.subr.mxu0 0.0
        %889 = vmatpush1.msra.mxu0 0.0
        %890 = vmatprep.subr.mxu0 0.0
        %891 = vmatpush1.msra.mxu0 0.0
        %892 = vmatprep.subr.mxu0 0.0
        %893 = vmatpush1.msra.mxu0 0.0
        %894 = vmatprep.subr.mxu0 0.0
        %895 = vmatpush1.msra.mxu0 0.0
        %896 = vmatprep.subr.mxu0 0.0
        %897 = vmatpush1.msra.mxu0 0.0
        %898 = vmatprep.subr.mxu0 0.0
        %899 = vmatpush1.msra.mxu0 0.0
        %900 = vmatprep.subr.mxu0 0.0
        %901 = vmatpush1.msra.mxu0 0.0
        %902 = vmatprep.subr.mxu0 0.0
        %903 = vmatpush1.msra.mxu0 0.0
        %904 = vmatprep.subr.mxu0 0.0
        %905 = vmatpush1.msra.mxu0 0.0
        %906 = vmatprep.subr.mxu0 0.0
        %907 = vmatpush1.msra.mxu0 0.0
        %908 = vmatprep.mubr.f32.mxu0 0.0
        %909 = vmatmul.mubr.f32.gmra.mrb[0].mxu0 %v457
        %v910 = vpop.f32.mrb[0].mxu0
        %v911 = vadd.f32 0.0, %v910
        %v912 = vpop.f32.mrb[0].mxu0
        %913 = vmatprep.mubr.f32.mxu0 0.0
        %914 = vmatmul.mubr.f32.gmra.mrb[0].mxu0 %v460
        %v915 = vpop.f32.mrb[0].mxu0
        %v916 = vadd.f32 0.0, %v915
        %v917 = vpop.f32.mrb[0].mxu0
        %918 = vmatprep.mubr.f32.mxu0 0.0
        %919 = vmatmul.mubr.f32.gmra.mrb[0].mxu0 %v463
        %v920 = vpop.f32.mrb[0].mxu0
        %v921 = vadd.f32 0.0, %v920
        %v922 = vpop.f32.mrb[0].mxu0
        %923 = vmatprep.mubr.f32.mxu0 0.0
        %924 = vmatmul.mubr.f32.gmra.mrb[0].mxu0 %v466
        %v925 = vpop.f32.mrb[0].mxu0
        %v926 = vadd.f32 0.0, %v925
        %v927 = vpop.f32.mrb[0].mxu0
        %928 = vdwg.mxu0
        %v929 = vrot.slane %v843, 4
        %v930 = vadd.f32 %v843, %v929
        %v931 = vrot.slane %v930, 2
        %v932 = vadd.f32 %v930, %v931
        %v933 = vrot.slane %v932, 1
        %v934 = vadd.f32 %v932, %v933
        %v935 = vmul.f32 %v911, 0.0125
        %v936 = vmul.f32 %v916, 0.0125
        %v937 = vmul.f32 %v921, 0.0125
        %v938 = vmul.f32 %v926, 0.0125
        %v939 = vsub.f32 %v751, %v935
        %v940 = vsub.f32 %v752, %v936
        %v941 = vsub.f32 %v753, %v937
        %v942 = vsub.f32 %v754, %v938
        %v943 = vmul.f32 %v934, 0.0125
        %v944 = vsub.f32 %v756, %v943
        %v946 = vlaneseq
        %v947 = vshrl.u32 %v946, 7
        %v948 = vsub.s32 0, %v947
        %v949 = vrot.slane %v944, %v948
        %951 = vmatprep.subr.mxu0 0.0
        %952 = vmatpush1.msra.mxu0 %v939
        %953 = vmatprep.subr.mxu0 0.0
        %954 = vmatpush1.msra.mxu0 %v940
        %955 = vmatprep.subr.mxu0 0.0
        %956 = vmatpush1.msra.mxu0 %v941
        %957 = vmatprep.subr.mxu0 0.0
        %958 = vmatpush1.msra.mxu0 %v942
        %959 = vmatprep.subr.mxu0 0.0
        %960 = vmatpush1.msra.mxu0 0.0
        %961 = vmatprep.subr.mxu0 0.0
        %962 = vmatpush1.msra.mxu0 0.0
        %963 = vmatprep.subr.mxu0 0.0
        %964 = vmatpush1.msra.mxu0 0.0
        %965 = vmatprep.subr.mxu0 0.0
        %966 = vmatpush1.msra.mxu0 0.0
        %967 = vmatprep.subr.mxu0 0.0
        %968 = vmatpush1.msra.mxu0 0.0
        %969 = vmatprep.subr.mxu0 0.0
        %970 = vmatpush1.msra.mxu0 0.0
        %971 = vmatprep.subr.mxu0 0.0
        %972 = vmatpush1.msra.mxu0 0.0
        %973 = vmatprep.subr.mxu0 0.0
        %974 = vmatpush1.msra.mxu0 0.0
        %975 = vmatprep.subr.mxu0 0.0
        %976 = vmatpush1.msra.mxu0 0.0
        %977 = vmatprep.subr.mxu0 0.0
        %978 = vmatpush1.msra.mxu0 0.0
        %979 = vmatprep.subr.mxu0 0.0
        %980 = vmatpush1.msra.mxu0 0.0
        %981 = vmatprep.subr.mxu0 0.0
        %982 = vmatpush1.msra.mxu0 0.0
        %983 = vmatprep.subr.mxu0 0.0
        %984 = vmatpush1.msra.mxu0 0.0
        %985 = vmatprep.subr.mxu0 0.0
        %986 = vmatpush1.msra.mxu0 0.0
        %987 = vmatprep.subr.mxu0 0.0
        %988 = vmatpush1.msra.mxu0 0.0
        %989 = vmatprep.subr.mxu0 0.0
        %990 = vmatpush1.msra.mxu0 0.0
        %991 = vmatprep.subr.mxu0 0.0
        %992 = vmatpush1.msra.mxu0 0.0
        %993 = vmatprep.subr.mxu0 0.0
        %994 = vmatpush1.msra.mxu0 0.0
        %995 = vmatprep.subr.mxu0 0.0
        %996 = vmatpush1.msra.mxu0 0.0
        %997 = vmatprep.subr.mxu0 0.0
        %998 = vmatpush1.msra.mxu0 0.0
        %999 = vmatprep.subr.mxu0 0.0
        %1000 = vmatpush1.msra.mxu0 0.0
        %1001 = vmatprep.subr.mxu0 0.0
        %1002 = vmatpush1.msra.mxu0 0.0
        %1003 = vmatprep.subr.mxu0 0.0
        %1004 = vmatpush1.msra.mxu0 0.0
        %1005 = vmatprep.subr.mxu0 0.0
        %1006 = vmatpush1.msra.mxu0 0.0
        %1007 = vmatprep.subr.mxu0 0.0
        %1008 = vmatpush1.msra.mxu0 0.0
        %1009 = vmatprep.subr.mxu0 0.0
        %1010 = vmatpush1.msra.mxu0 0.0
        %1011 = vmatprep.subr.mxu0 0.0
        %1012 = vmatpush1.msra.mxu0 0.0
        %1013 = vmatprep.subr.mxu0 0.0
        %1014 = vmatpush1.msra.mxu0 0.0
        %1015 = vmatprep.mubr.f32.mxu0 0.0
        %1016 = vmatmul.mubr.f32.gmra.mrb[0].mxu0 %v340
        %v1017 = vpop.f32.mrb[0].mxu0
        %v1018 = vadd.f32 %v949, %v1017
        %v1019 = vpop.f32.mrb[0].mxu0
        %1020 = vdwg.mxu0
        %1021 = vmax.xlane.f32.xlu0 %v1018
        %v1022 = vpop.xlane.xlu0 %1021
        %v1023 = vsub.f32 %v1018, %v1022
        %v1024 = vmul.f32 %v1023, 1.442695
        %v1025 = vpow.pop %v1024
        %1026 = vadd.xlane.f32.xlu0 %v1025
        %v1027 = vpop.xlane.xlu0 %1026
        %v1028 = vrcp.pop %v1027
        %v1029 = vmul.f32 %v1025, %v1028
        %v1030 = vsub.f32 %v1029, 1.0
        %v1031 = vsel %vm326, %v1030, %v1029
        %1032 = vmatprep.subr.mxu0 0.0
        %1033 = vmatpush1.msra.mxu0 %v1031
        %1034 = vmatprep.subr.mxu0 0.0
        %1035 = vmatpush1.msra.mxu0 0.0
        %1036 = vmatprep.subr.mxu0 0.0
        %1037 = vmatpush1.msra.mxu0 0.0
        %1038 = vmatprep.subr.mxu0 0.0
        %1039 = vmatpush1.msra.mxu0 0.0
        %1040 = vmatprep.subr.mxu0 0.0
        %1041 = vmatpush1.msra.mxu0 0.0
        %1042 = vmatprep.subr.mxu0 0.0
        %1043 = vmatpush1.msra.mxu0 0.0
        %1044 = vmatprep.subr.mxu0 0.0
        %1045 = vmatpush1.msra.mxu0 0.0
        %1046 = vmatprep.subr.mxu0 0.0
        %1047 = vmatpush1.msra.mxu0 0.0
        %1048 = vmatprep.subr.mxu0 0.0
        %1049 = vmatpush1.msra.mxu0 0.0
        %1050 = vmatprep.subr.mxu0 0.0
        %1051 = vmatpush1.msra.mxu0 0.0
        %1052 = vmatprep.subr.mxu0 0.0
        %1053 = vmatpush1.msra.mxu0 0.0
        %1054 = vmatprep.subr.mxu0 0.0
        %1055 = vmatpush1.msra.mxu0 0.0
        %1056 = vmatprep.subr.mxu0 0.0
        %1057 = vmatpush1.msra.mxu0 0.0
        %1058 = vmatprep.subr.mxu0 0.0
        %1059 = vmatpush1.msra.mxu0 0.0
        %1060 = vmatprep.subr.mxu0 0.0
        %1061 = vmatpush1.msra.mxu0 0.0
        %1062 = vmatprep.subr.mxu0 0.0
        %1063 = vmatpush1.msra.mxu0 0.0
        %1064 = vmatprep.subr.mxu0 0.0
        %1065 = vmatpush1.msra.mxu0 0.0
        %1066 = vmatprep.subr.mxu0 0.0
        %1067 = vmatpush1.msra.mxu0 0.0
        %1068 = vmatprep.subr.mxu0 0.0
        %1069 = vmatpush1.msra.mxu0 0.0
        %1070 = vmatprep.subr.mxu0 0.0
        %1071 = vmatpush1.msra.mxu0 0.0
        %1072 = vmatprep.subr.mxu0 0.0
        %1073 = vmatpush1.msra.mxu0 0.0
        %1074 = vmatprep.subr.mxu0 0.0
        %1075 = vmatpush1.msra.mxu0 0.0
        %1076 = vmatprep.subr.mxu0 0.0
        %1077 = vmatpush1.msra.mxu0 0.0
        %1078 = vmatprep.subr.mxu0 0.0
        %1079 = vmatpush1.msra.mxu0 0.0
        %1080 = vmatprep.subr.mxu0 0.0
        %1081 = vmatpush1.msra.mxu0 0.0
        %1082 = vmatprep.subr.mxu0 0.0
        %1083 = vmatpush1.msra.mxu0 0.0
        %1084 = vmatprep.subr.mxu0 0.0
        %1085 = vmatpush1.msra.mxu0 0.0
        %1086 = vmatprep.subr.mxu0 0.0
        %1087 = vmatpush1.msra.mxu0 0.0
        %1088 = vmatprep.subr.mxu0 0.0
        %1089 = vmatpush1.msra.mxu0 0.0
        %1090 = vmatprep.subr.mxu0 0.0
        %1091 = vmatpush1.msra.mxu0 0.0
        %1092 = vmatprep.subr.mxu0 0.0
        %1093 = vmatpush1.msra.mxu0 0.0
        %1094 = vmatprep.subr.mxu0 0.0
        %1095 = vmatpush1.msra.mxu0 0.0
        %1096 = vmatprep.mubr.f32.mxu0 0.0
        %1097 = vmatmul.mubr.f32.gmra.mrb[0].mxu0 %v457
        %v1098 = vpop.f32.mrb[0].mxu0
        %v1099 = vadd.f32 0.0, %v1098
        %v1100 = vpop.f32.mrb[0].mxu0
        %1101 = vmatprep.mubr.f32.mxu0 0.0
        %1102 = vmatmul.mubr.f32.gmra.mrb[0].mxu0 %v460
        %v1103 = vpop.f32.mrb[0].mxu0
        %v1104 = vadd.f32 0.0, %v1103
        %v1105 = vpop.f32.mrb[0].mxu0
        %1106 = vmatprep.mubr.f32.mxu0 0.0
        %1107 = vmatmul.mubr.f32.gmra.mrb[0].mxu0 %v463
        %v1108 = vpop.f32.mrb[0].mxu0
        %v1109 = vadd.f32 0.0, %v1108
        %v1110 = vpop.f32.mrb[0].mxu0
        %1111 = vmatprep.mubr.f32.mxu0 0.0
        %1112 = vmatmul.mubr.f32.gmra.mrb[0].mxu0 %v466
        %v1113 = vpop.f32.mrb[0].mxu0
        %v1114 = vadd.f32 0.0, %v1113
        %v1115 = vpop.f32.mrb[0].mxu0
        %1116 = vdwg.mxu0
        %v1117 = vrot.slane %v1031, 4
        %v1118 = vadd.f32 %v1031, %v1117
        %v1119 = vrot.slane %v1118, 2
        %v1120 = vadd.f32 %v1118, %v1119
        %v1121 = vrot.slane %v1120, 1
        %v1122 = vadd.f32 %v1120, %v1121
        %v1123 = vmul.f32 %v1099, 0.0125
        %v1124 = vmul.f32 %v1104, 0.0125
        %v1125 = vmul.f32 %v1109, 0.0125
        %v1126 = vmul.f32 %v1114, 0.0125
        %v1127 = vsub.f32 %v939, %v1123
        %v1128 = vsub.f32 %v940, %v1124
        %v1129 = vsub.f32 %v941, %v1125
        %v1130 = vsub.f32 %v942, %v1126
        %v1131 = vmul.f32 %v1122, 0.0125
        %v1132 = vsub.f32 %v944, %v1131
        %v1134 = vlaneseq
        %v1135 = vshrl.u32 %v1134, 7
        %v1136 = vsub.s32 0, %v1135
        %v1137 = vrot.slane %v1132, %v1136
        %1139 = vmatprep.subr.mxu0 0.0
        %1140 = vmatpush1.msra.mxu0 %v1127
        %1141 = vmatprep.subr.mxu0 0.0
        %1142 = vmatpush1.msra.mxu0 %v1128
        %1143 = vmatprep.subr.mxu0 0.0
        %1144 = vmatpush1.msra.mxu0 %v1129
        %1145 = vmatprep.subr.mxu0 0.0
        %1146 = vmatpush1.msra.mxu0 %v1130
        %1147 = vmatprep.subr.mxu0 0.0
        %1148 = vmatpush1.msra.mxu0 0.0
        %1149 = vmatprep.subr.mxu0 0.0
        %1150 = vmatpush1.msra.mxu0 0.0
        %1151 = vmatprep.subr.mxu0 0.0
        %1152 = vmatpush1.msra.mxu0 0.0
        %1153 = vmatprep.subr.mxu0 0.0
        %1154 = vmatpush1.msra.mxu0 0.0
        %1155 = vmatprep.subr.mxu0 0.0
        %1156 = vmatpush1.msra.mxu0 0.0
        %1157 = vmatprep.subr.mxu0 0.0
        %1158 = vmatpush1.msra.mxu0 0.0
        %1159 = vmatprep.subr.mxu0 0.0
        %1160 = vmatpush1.msra.mxu0 0.0
        %1161 = vmatprep.subr.mxu0 0.0
        %1162 = vmatpush1.msra.mxu0 0.0
        %1163 = vmatprep.subr.mxu0 0.0
        %1164 = vmatpush1.msra.mxu0 0.0
        %1165 = vmatprep.subr.mxu0 0.0
        %1166 = vmatpush1.msra.mxu0 0.0
        %1167 = vmatprep.subr.mxu0 0.0
        %1168 = vmatpush1.msra.mxu0 0.0
        %1169 = vmatprep.subr.mxu0 0.0
        %1170 = vmatpush1.msra.mxu0 0.0
        %1171 = vmatprep.subr.mxu0 0.0
        %1172 = vmatpush1.msra.mxu0 0.0
        %1173 = vmatprep.subr.mxu0 0.0
        %1174 = vmatpush1.msra.mxu0 0.0
        %1175 = vmatprep.subr.mxu0 0.0
        %1176 = vmatpush1.msra.mxu0 0.0
        %1177 = vmatprep.subr.mxu0 0.0
        %1178 = vmatpush1.msra.mxu0 0.0
        %1179 = vmatprep.subr.mxu0 0.0
        %1180 = vmatpush1.msra.mxu0 0.0
        %1181 = vmatprep.subr.mxu0 0.0
        %1182 = vmatpush1.msra.mxu0 0.0
        %1183 = vmatprep.subr.mxu0 0.0
        %1184 = vmatpush1.msra.mxu0 0.0
        %1185 = vmatprep.subr.mxu0 0.0
        %1186 = vmatpush1.msra.mxu0 0.0
        %1187 = vmatprep.subr.mxu0 0.0
        %1188 = vmatpush1.msra.mxu0 0.0
        %1189 = vmatprep.subr.mxu0 0.0
        %1190 = vmatpush1.msra.mxu0 0.0
        %1191 = vmatprep.subr.mxu0 0.0
        %1192 = vmatpush1.msra.mxu0 0.0
        %1193 = vmatprep.subr.mxu0 0.0
        %1194 = vmatpush1.msra.mxu0 0.0
        %1195 = vmatprep.subr.mxu0 0.0
        %1196 = vmatpush1.msra.mxu0 0.0
        %1197 = vmatprep.subr.mxu0 0.0
        %1198 = vmatpush1.msra.mxu0 0.0
        %1199 = vmatprep.subr.mxu0 0.0
        %1200 = vmatpush1.msra.mxu0 0.0
        %1201 = vmatprep.subr.mxu0 0.0
        %1202 = vmatpush1.msra.mxu0 0.0
        %1203 = vmatprep.mubr.f32.mxu0 0.0
        %1204 = vmatmul.mubr.f32.gmra.mrb[0].mxu0 %v340
        %v1205 = vpop.f32.mrb[0].mxu0
        %v1206 = vadd.f32 %v1137, %v1205
        %v1207 = vpop.f32.mrb[0].mxu0
        %1208 = vdwg.mxu0
        %1209 = vmax.xlane.f32.xlu0 %v1206
        %v1210 = vpop.xlane.xlu0 %1209
        %v1211 = vsub.f32 %v1206, %v1210
        %v1212 = vmul.f32 %v1211, 1.442695
        %v1213 = vpow.pop %v1212
        %1214 = vadd.xlane.f32.xlu0 %v1213
        %v1215 = vpop.xlane.xlu0 %1214
        %v1216 = vrcp.pop %v1215
        %v1217 = vmul.f32 %v1213, %v1216
        %v1218 = vsub.f32 %v1217, 1.0
        %v1219 = vsel %vm326, %v1218, %v1217
        %1220 = vmatprep.subr.mxu0 0.0
        %1221 = vmatpush1.msra.mxu0 %v1219
        %1222 = vmatprep.subr.mxu0 0.0
        %1223 = vmatpush1.msra.mxu0 0.0
        %1224 = vmatprep.subr.mxu0 0.0
        %1225 = vmatpush1.msra.mxu0 0.0
        %1226 = vmatprep.subr.mxu0 0.0
        %1227 = vmatpush1.msra.mxu0 0.0
        %1228 = vmatprep.subr.mxu0 0.0
        %1229 = vmatpush1.msra.mxu0 0.0
        %1230 = vmatprep.subr.mxu0 0.0
        %1231 = vmatpush1.msra.mxu0 0.0
        %1232 = vmatprep.subr.mxu0 0.0
        %1233 = vmatpush1.msra.mxu0 0.0
        %1234 = vmatprep.subr.mxu0 0.0
        %1235 = vmatpush1.msra.mxu0 0.0
        %1236 = vmatprep.subr.mxu0 0.0
        %1237 = vmatpush1.msra.mxu0 0.0
        %1238 = vmatprep.subr.mxu0 0.0
        %1239 = vmatpush1.msra.mxu0 0.0
        %1240 = vmatprep.subr.mxu0 0.0
        %1241 = vmatpush1.msra.mxu0 0.0
        %1242 = vmatprep.subr.mxu0 0.0
        %1243 = vmatpush1.msra.mxu0 0.0
        %1244 = vmatprep.subr.mxu0 0.0
        %1245 = vmatpush1.msra.mxu0 0.0
        %1246 = vmatprep.subr.mxu0 0.0
        %1247 = vmatpush1.msra.mxu0 0.0
        %1248 = vmatprep.subr.mxu0 0.0
        %1249 = vmatpush1.msra.mxu0 0.0
        %1250 = vmatprep.subr.mxu0 0.0
        %1251 = vmatpush1.msra.mxu0 0.0
        %1252 = vmatprep.subr.mxu0 0.0
        %1253 = vmatpush1.msra.mxu0 0.0
        %1254 = vmatprep.subr.mxu0 0.0
        %1255 = vmatpush1.msra.mxu0 0.0
        %1256 = vmatprep.subr.mxu0 0.0
        %1257 = vmatpush1.msra.mxu0 0.0
        %1258 = vmatprep.subr.mxu0 0.0
        %1259 = vmatpush1.msra.mxu0 0.0
        %1260 = vmatprep.subr.mxu0 0.0
        %1261 = vmatpush1.msra.mxu0 0.0
        %1262 = vmatprep.subr.mxu0 0.0
        %1263 = vmatpush1.msra.mxu0 0.0
        %1264 = vmatprep.subr.mxu0 0.0
        %1265 = vmatpush1.msra.mxu0 0.0
        %1266 = vmatprep.subr.mxu0 0.0
        %1267 = vmatpush1.msra.mxu0 0.0
        %1268 = vmatprep.subr.mxu0 0.0
        %1269 = vmatpush1.msra.mxu0 0.0
        %1270 = vmatprep.subr.mxu0 0.0
        %1271 = vmatpush1.msra.mxu0 0.0
        %1272 = vmatprep.subr.mxu0 0.0
        %1273 = vmatpush1.msra.mxu0 0.0
        %1274 = vmatprep.subr.mxu0 0.0
        %1275 = vmatpush1.msra.mxu0 0.0
        %1276 = vmatprep.subr.mxu0 0.0
        %1277 = vmatpush1.msra.mxu0 0.0
        %1278 = vmatprep.subr.mxu0 0.0
        %1279 = vmatpush1.msra.mxu0 0.0
        %1280 = vmatprep.subr.mxu0 0.0
        %1281 = vmatpush1.msra.mxu0 0.0
        %1282 = vmatprep.subr.mxu0 0.0
        %1283 = vmatpush1.msra.mxu0 0.0
        %1284 = vmatprep.mubr.f32.mxu0 0.0
        %1285 = vmatmul.mubr.f32.gmra.mrb[0].mxu0 %v457
        %v1286 = vpop.f32.mrb[0].mxu0
        %v1287 = vadd.f32 0.0, %v1286
        %v1288 = vpop.f32.mrb[0].mxu0
        %1289 = vmatprep.mubr.f32.mxu0 0.0
        %1290 = vmatmul.mubr.f32.gmra.mrb[0].mxu0 %v460
        %v1291 = vpop.f32.mrb[0].mxu0
        %v1292 = vadd.f32 0.0, %v1291
        %v1293 = vpop.f32.mrb[0].mxu0
        %1294 = vmatprep.mubr.f32.mxu0 0.0
        %1295 = vmatmul.mubr.f32.gmra.mrb[0].mxu0 %v463
        %v1296 = vpop.f32.mrb[0].mxu0
        %v1297 = vadd.f32 0.0, %v1296
        %v1298 = vpop.f32.mrb[0].mxu0
        %1299 = vmatprep.mubr.f32.mxu0 0.0
        %1300 = vmatmul.mubr.f32.gmra.mrb[0].mxu0 %v466
        %v1301 = vpop.f32.mrb[0].mxu0
        %v1302 = vadd.f32 0.0, %v1301
        %v1303 = vpop.f32.mrb[0].mxu0
        %1304 = vdwg.mxu0
        %v1305 = vrot.slane %v1219, 4
        %v1306 = vadd.f32 %v1219, %v1305
        %v1307 = vrot.slane %v1306, 2
        %v1308 = vadd.f32 %v1306, %v1307
        %v1309 = vrot.slane %v1308, 1
        %v1310 = vadd.f32 %v1308, %v1309
        %v1311 = vmul.f32 %v1287, 0.0125
        %v1312 = vmul.f32 %v1292, 0.0125
        %v1313 = vmul.f32 %v1297, 0.0125
        %v1314 = vmul.f32 %v1302, 0.0125
        %v1315 = vsub.f32 %v1127, %v1311
        %v1316 = vsub.f32 %v1128, %v1312
        %v1317 = vsub.f32 %v1129, %v1313
        %v1318 = vsub.f32 %v1130, %v1314
        %v1319 = vmul.f32 %v1310, 0.0125
        %v1320 = vsub.f32 %v1132, %v1319
        %v1322 = vlaneseq
        %v1323 = vshrl.u32 %v1322, 7
        %v1324 = vsub.s32 0, %v1323
        %v1325 = vrot.slane %v1320, %v1324
        %1327 = vmatprep.subr.mxu0 0.0
        %1328 = vmatpush1.msra.mxu0 %v1315
        %1329 = vmatprep.subr.mxu0 0.0
        %1330 = vmatpush1.msra.mxu0 %v1316
        %1331 = vmatprep.subr.mxu0 0.0
        %1332 = vmatpush1.msra.mxu0 %v1317
        %1333 = vmatprep.subr.mxu0 0.0
        %1334 = vmatpush1.msra.mxu0 %v1318
        %1335 = vmatprep.subr.mxu0 0.0
        %1336 = vmatpush1.msra.mxu0 0.0
        %1337 = vmatprep.subr.mxu0 0.0
        %1338 = vmatpush1.msra.mxu0 0.0
        %1339 = vmatprep.subr.mxu0 0.0
        %1340 = vmatpush1.msra.mxu0 0.0
        %1341 = vmatprep.subr.mxu0 0.0
        %1342 = vmatpush1.msra.mxu0 0.0
        %1343 = vmatprep.subr.mxu0 0.0
        %1344 = vmatpush1.msra.mxu0 0.0
        %1345 = vmatprep.subr.mxu0 0.0
        %1346 = vmatpush1.msra.mxu0 0.0
        %1347 = vmatprep.subr.mxu0 0.0
        %1348 = vmatpush1.msra.mxu0 0.0
        %1349 = vmatprep.subr.mxu0 0.0
        %1350 = vmatpush1.msra.mxu0 0.0
        %1351 = vmatprep.subr.mxu0 0.0
        %1352 = vmatpush1.msra.mxu0 0.0
        %1353 = vmatprep.subr.mxu0 0.0
        %1354 = vmatpush1.msra.mxu0 0.0
        %1355 = vmatprep.subr.mxu0 0.0
        %1356 = vmatpush1.msra.mxu0 0.0
        %1357 = vmatprep.subr.mxu0 0.0
        %1358 = vmatpush1.msra.mxu0 0.0
        %1359 = vmatprep.subr.mxu0 0.0
        %1360 = vmatpush1.msra.mxu0 0.0
        %1361 = vmatprep.subr.mxu0 0.0
        %1362 = vmatpush1.msra.mxu0 0.0
        %1363 = vmatprep.subr.mxu0 0.0
        %1364 = vmatpush1.msra.mxu0 0.0
        %1365 = vmatprep.subr.mxu0 0.0
        %1366 = vmatpush1.msra.mxu0 0.0
        %1367 = vmatprep.subr.mxu0 0.0
        %1368 = vmatpush1.msra.mxu0 0.0
        %1369 = vmatprep.subr.mxu0 0.0
        %1370 = vmatpush1.msra.mxu0 0.0
        %1371 = vmatprep.subr.mxu0 0.0
        %1372 = vmatpush1.msra.mxu0 0.0
        %1373 = vmatprep.subr.mxu0 0.0
        %1374 = vmatpush1.msra.mxu0 0.0
        %1375 = vmatprep.subr.mxu0 0.0
        %1376 = vmatpush1.msra.mxu0 0.0
        %1377 = vmatprep.subr.mxu0 0.0
        %1378 = vmatpush1.msra.mxu0 0.0
        %1379 = vmatprep.subr.mxu0 0.0
        %1380 = vmatpush1.msra.mxu0 0.0
        %1381 = vmatprep.subr.mxu0 0.0
        %1382 = vmatpush1.msra.mxu0 0.0
        %1383 = vmatprep.subr.mxu0 0.0
        %1384 = vmatpush1.msra.mxu0 0.0
        %1385 = vmatprep.subr.mxu0 0.0
        %1386 = vmatpush1.msra.mxu0 0.0
        %1387 = vmatprep.subr.mxu0 0.0
        %1388 = vmatpush1.msra.mxu0 0.0
        %1389 = vmatprep.subr.mxu0 0.0
        %1390 = vmatpush1.msra.mxu0 0.0
        %1391 = vmatprep.mubr.f32.mxu0 0.0
        %1392 = vmatmul.mubr.f32.gmra.mrb[0].mxu0 %v340
        %v1393 = vpop.f32.mrb[0].mxu0
        %v1394 = vadd.f32 %v1325, %v1393
        %v1395 = vpop.f32.mrb[0].mxu0
        %1396 = vdwg.mxu0
        %1397 = vst [vmem:[%s315] sm:$0xff] %v1315
        %1398 = vst [vmem:[%s315 + $0x8] sm:$0xff] %v1316
        %1399 = vst [vmem:[%s315 + $0x10] sm:$0xff] %v1317
        %1400 = vst [vmem:[%s315 + $0x18] sm:$0xff] %v1318
        %1401 = vst [vmem:[%s318] sm:$0x1] %v1320
        %1402 = vst [vmem:[%s294] sm:$0xff] %v1394
        %p1403 = scmp.lt.s32.totalorder %s21, 3
        %s1404 = scalar_select %p1403, %s21, 3
        %s1405 = smul.addr %s1404, 4
        %s1406 = smul.addr %s1405, 8
        %s1407 = scalar_lea.vmem %s4, %s1406
        %p1408 = scmp.lt.s32.totalorder %s21, 3
        %s1409 = scalar_select %p1408, %s21, 3
        %s1410 = scalar_lea.vmem %s5, %s1409
        %s1411 = sand.u32 %s185, 1
        %s1412 = scalar_lea.sflag [#allocation3], %s1411
        %s1413 = sand.u32 %s185, 1
        %s1414 = smul.addr %s1413, 8
        %s1415 = scalar_lea.vmem [#allocation2], %s1414
        // Predicated region
        $region37: #{gd_learner_forward_batched.1} parent=35 // pred_check
          %p1416 = pneg %p143
        $region38: #{gd_learner_forward_batched.1} parent=35 // pred_check_branch
          %1418 = sbr.rel (%p1416) target = $region40
        $region39: #{gd_learner_forward_batched.1} parent=35 // pred_region
          _
        $region40: #{gd_learner_forward_batched.1} parent=35 // pred_fallthru
          _
        // Predicated region
        $region41: #{gd_learner_forward_batched.1} parent=35 // pred_check
          %p1419 = pneg %p169
        $region42: #{gd_learner_forward_batched.1} parent=35 // pred_check_branch
          %1421 = sbr.rel (%p1419) target = $region44
        $region43: #{gd_learner_forward_batched.1} parent=35 // pred_region
          _
        $region44: #{gd_learner_forward_batched.1} parent=35 // pred_fallthru
          _
        // Predicated region
        $region45: #{gd_learner_forward_batched.1} parent=35 // pred_check
          %p1422 = pneg %p195
        $region46: #{gd_learner_forward_batched.1} parent=35 // pred_check_branch
          %1424 = sbr.rel (%p1422) target = $region48
        $region47: #{gd_learner_forward_batched.1} parent=35 // pred_region
          %s1426 = ssub.s32 128, 128
          %1427 = vsyncadd %s1412, %s1426
          %s1428 = smul.addr %s21, 128
          %s1429 = scalar_lea.hbm %s6, %s1428
          %s1431 = sshll.u32 %s1415, 4
          %s1432 = int_to_ptr.vmem [resolvable:$true] %s1431
          %1434 = dma.vmem_to_hbm [thread:$0]  %s1432, 128, %s1429, %s1412
        $region48: #{gd_learner_forward_batched.1} parent=35 // pred_fallthru
          _
      $region36: #{gd_learner_forward_batched.1} parent=5 // pred_fallthru
        _
      %p1435 = scmp.le.s32.totalorder 2, %s16
      // Predicated region
      $region49: #{gd_learner_forward_batched.1} parent=5 // pred_check
        %p1436 = pneg %p1435
      $region50: #{gd_learner_forward_batched.1} parent=5 // pred_check_branch
        %1438 = sbr.rel (%p1436) target = $region52
      $region51: #{gd_learner_forward_batched.1} parent=5 // pred_region
        %s1439 = ssub.s32 %s16, 2
        // Predicated region
        $region53: #{gd_learner_forward_batched.1} parent=51 // pred_check
          %p1440 = pneg %p149
        $region54: #{gd_learner_forward_batched.1} parent=51 // pred_check_branch
          %1442 = sbr.rel (%p1440) target = $region56
        $region55: #{gd_learner_forward_batched.1} parent=51 // pred_region
          %p1443 = scmp.lt.s32.totalorder %s22, 3
          %s1444 = scalar_select %p1443, %s22, 3
          %s1445 = smul.addr %s1444, 4
          %s1446 = smul.addr %s1445, 8
          %s1447 = scalar_lea.vmem %s4, %s1446
        $region56: #{gd_learner_forward_batched.1} parent=51 // pred_fallthru
          _
        // Predicated region
        $region57: #{gd_learner_forward_batched.1} parent=51 // pred_check
          %p1448 = pneg %p175
        $region58: #{gd_learner_forward_batched.1} parent=51 // pred_check_branch
          %1450 = sbr.rel (%p1448) target = $region60
        $region59: #{gd_learner_forward_batched.1} parent=51 // pred_region
          %p1451 = scmp.lt.s32.totalorder %s22, 3
          %s1452 = scalar_select %p1451, %s22, 3
          %s1453 = scalar_lea.vmem %s5, %s1452
        $region60: #{gd_learner_forward_batched.1} parent=51 // pred_fallthru
          _
        // Predicated region
        $region61: #{gd_learner_forward_batched.1} parent=51 // pred_check
          %p1454 = pneg %p201
        $region62: #{gd_learner_forward_batched.1} parent=51 // pred_check_branch
          %1456 = sbr.rel (%p1454) target = $region64
        $region63: #{gd_learner_forward_batched.1} parent=51 // pred_region
          %s1457 = sand.u32 %s186, 1
          %s1458 = scalar_lea.sflag [#allocation3], %s1457
          %s1459 = sand.u32 %s186, 1
          %s1460 = smul.addr %s1459, 8
          %s1461 = scalar_lea.vmem [#allocation2], %s1460
          %1462 = dma.done %s1458, 128
        $region64: #{gd_learner_forward_batched.1} parent=51 // pred_fallthru
          _
      $region52: #{gd_learner_forward_batched.1} parent=5 // pred_fallthru
        _
    $region6: #{gd_learner_forward_batched.1} parent=1 // loop_footer
      %s20 = sadd.s32 1, %s16
    $region7: #{gd_learner_forward_batched.1} parent=1 // loop_footer_branch
      %15 = sbr.rel target = $region3
    $region8: #{gd_learner_forward_batched.1} parent=1 // loop_exit
      _
    %1463 = vsyncpa [#allocation3], 1
    %s1464 = scalar_lea.sflag [#allocation3], 1
    %1465 = vsyncpa %s1464, 1

</llo_original>
